<compile_context>
chip_gen: v5e
topology: v5e:2x2
jax: 0.10.0
libtpu: 0.0.40
codegen_flags: <defaults>
</compile_context>

<pallas_src>
import functools

import jax
import jax.numpy as jnp
from jax.experimental import pallas as pl
from jax.experimental.pallas import tpu as pltpu

KSIZE = 3
DIL1, DIL2 = 2, 1                  # conv1 dilation=2, conv2 dilation=1
PAD1 = (KSIZE // 2) * DIL1         # = 2 -> "same"
PAD2 = (KSIZE // 2) * DIL2         # = 1 -> "same"

# Row index inside the precomputed mask array for each nonzero column shift.
_MASK_SHIFTS = (-2, -1, 1, 2)
_MASK_ROW = {dx: i for i, dx in enumerate(_MASK_SHIFTS)}


def _round_up(x, m):
    return ((x + m - 1) // m) * m


def _dblock_inv1_kernel(x_ref, w1_ref, b1_ref, w2_ref, b2_ref, mask_ref,
                        o_ref, xp_ref, y1p_ref, *slab,
                        H, W, RH, base1, base2, per_tap):
    """Fused (dilated conv3x3 + ReLU) x2 for one batch element.

    x_ref   : (1, C, H*W)            input, flattened spatial (compute dtype)
    w1_ref  : per_tap -> (9, C, C)   else (C, 9*C)   conv1 weight
    b1_ref  : (C, 1) f32             conv1 bias
    w2_ref  : same layout as w1_ref  conv2 weight
    b2_ref  : (C, 1) f32             conv2 bias
    mask_ref: (4, RH*W)              column-validity masks for dx=-2,-1,1,2
    o_ref   : (1, C, H*W)            output, flattened spatial
    xp_ref  : (C, L1) VMEM           row-padded input  (interior at base1)
    y1p_ref : (C, L2) VMEM           row-padded intermediate (interior at base2)
    slab    : optional (9*C, RH*W) VMEM im2col slab (only in the non-per_tap path)
    """
    C = x_ref.shape[1]
    RHW = RH * W
    HW = H * W
    n_chunks = H // RH
    slab_ref = slab[0] if slab else None
    L1 = xp_ref.shape[1]
    L2 = y1p_ref.shape[1]

    # ---- zero ONLY the halo regions, and only once per pallas_call ---------
    # The interiors are fully overwritten every grid step and the halos are
    # never written, so the zeros persist across the (sequential) batch grid.
    @pl.when(pl.program_id(0) == 0)
    def _zero_halos():
        xp_ref[:, 0:base1] = jnp.zeros((C, base1), xp_ref.dtype)
        xp_ref[:, base1 + HW:L1] = jnp.zeros((C, L1 - base1 - HW), xp_ref.dtype)
        y1p_ref[:, 0:base2] = jnp.zeros((C, base2), y1p_ref.dtype)
        y1p_ref[:, base2 + HW:L2] = jnp.zeros((C, L2 - base2 - HW), y1p_ref.dtype)

    # ---- stage the input interior (128-aligned base -> aligned stores) -----
    # TODO(synk): replace with a direct HBM->VMEM DMA into xp_ref[:, base1:...]
    xp_ref[:, base1:base1 + HW] = x_ref[0]

    # Bias broadcasts hoisted out of the chunk loops (no per-chunk re-broadcast).
    b1b = jnp.broadcast_to(b1_ref[...], (C, RHW))
    b2b = jnp.broadcast_to(b2_ref[...], (C, RHW))

    def tap_slice(src_ref, base, pad, dil, r, ky, kx):
        # Tap (ky, kx) for output rows [r, r+RH) is a flat shift of dy*W+dx in
        # the row-padded source plus a column mask zeroing lanes that wrapped
        # into a neighbouring image row.
        dy = ky * dil - pad
        dx = kx * dil - pad
        start = base + (r + dy) * W + dx          # static offset
        sl = src_ref[:, start:start + RHW]        # (C, RH*W)
        if dx != 0:
            row = _MASK_ROW[dx]
            sl = sl * mask_ref[row:row + 1, :]    # lane mask
        return sl

    def conv_relu_chunk(src_ref, w_ref, b_bcast, base, pad, dil, r):
        if per_tap:
            # 9 per-tap MXU matmuls accumulated in f32; bias folded into the
            # accumulator init.  No slab store/reload traffic.
            acc = b_bcast
            for ky in range(KSIZE):
                for kx in range(KSIZE):
                    sl = tap_slice(src_ref, base, pad, dil, r, ky, kx)
                    acc = acc + jnp.dot(w_ref[ky * KSIZE + kx], sl,
                                        preferred_element_type=jnp.float32)
            return jnp.maximum(acc, 0.0)
        # Small-C path: one deep-contraction matmul (C,9C)@(9C,RH*W) over an
        # im2col slab (better MXU shape when C is tiny).
        for ky in range(KSIZE):
            for kx in range(KSIZE):
                tap = ky * KSIZE + kx
                slab_ref[tap * C:(tap + 1) * C, :] = tap_slice(
                    src_ref, base, pad, dil, r, ky, kx)
        acc = jnp.dot(w_ref[...], slab_ref[...],
                      preferred_element_type=jnp.float32)
        return jnp.maximum(acc + b_bcast, 0.0)

    # ---- conv1: k=3, dilation=2, pad=2 -> intermediate stays in VMEM -------
    for c in range(n_chunks):
        r = c * RH
        y1 = conv_relu_chunk(xp_ref, w1_ref, b1b, base1, PAD1, DIL1, r)
        dst = base2 + r * W
        y1p_ref[:, dst:dst + RHW] = y1.astype(y1p_ref.dtype)

    # ---- conv2: k=3, dilation=1, pad=1 -> lane-dense aligned output stores --
    for c in range(n_chunks):
        r = c * RH
        y2 = conv_relu_chunk(y1p_ref, w2_ref, b2b, base2, PAD2, DIL2, r)
        o_ref[0, :, r * W:r * W + RHW] = y2.astype(o_ref.dtype)


def _pick_row_chunk(H, W, max_cols=2048):
    """Largest divisor RH of H with RH*W a multiple of 128 and <= max_cols;
    falls back to the largest divisor with RH*W <= max_cols (masked stores)."""
    best = None
    for rh in range(1, H + 1):
        if H % rh == 0 and rh * W <= max_cols and (rh * W) % 128 == 0:
            best = rh
    if best is not None:
        return best
    # TODO(synk): pad W up to a 128-friendly width instead of degrading to
    # masked stores when no divisor of H gives RH*W % 128 == 0.
    best = 1
    for rh in range(1, H + 1):
        if H % rh == 0 and rh * W <= max_cols:
            best = rh
    return best


def _vmem_limit_bytes():
    """Generation-aware VMEM limit: ~75% of physical, capped at 100 MiB
    (v5e/v6e 128 MiB -> 96 MiB; v7x 64 MiB -> 48 MiB)."""
    cap = 128 * 1024 * 1024
    try:
        info = pltpu.get_tpu_info()
        cap = int(getattr(info, "vmem_capacity_bytes", cap) or cap)
    except Exception:
        pass
    return max(32 * 1024 * 1024, min((cap * 3) // 4, 100 * 1024 * 1024))


def dblock_inv1(x_nchw, params, *, compute_dtype=jnp.bfloat16, row_chunk=None,
                per_tap=None, interpret=False):
    """DBlock_inv1.forward.  x_nchw: (N, C, H, W) -> (N, C, H, W)."""
    w1, b1, w2, b2 = params
    N, Cin, H, W = x_nchw.shape
    Cout = w1.shape[0]
    # The second conv is declared with `in_channels` inputs but consumes the
    # first conv's output, so a runnable configuration needs Cin == Cout.
    assert Cin == Cout, "DBlock_inv1 requires in_channels == out_channels"
    assert w1.shape == (Cout, Cin, KSIZE, KSIZE)
    assert w2.shape == (Cout, Cin, KSIZE, KSIZE)
    C = Cin
    HW = H * W

    RH = row_chunk if row_chunk is not None else _pick_row_chunk(H, W)
    assert H % RH == 0, "row_chunk must divide H"
    RHW = RH * W

    if per_tap is None:
        per_tap = C >= 64            # per-tap accumulate for ELIC-sized C

    cdt = compute_dtype
    out_dtype = x_nchw.dtype

    # Lane-dense flattened-spatial layout (minor dim = H*W); free XLA reshape.
    x_flat = x_nchw.reshape(N, C, HW).astype(cdt)

    if per_tap:
        # (Cout, Cin, K, K) -> (K*K, Cout, Cin): static leading-axis tap index
        # inside the kernel (no lane-misaligned weight slices).
        def to_layout(w):
            return jnp.transpose(w, (2, 3, 0, 1)).reshape(
                KSIZE * KSIZE, Cout, Cin).astype(cdt)
        w_spec = pl.BlockSpec((KSIZE * KSIZE, C, C), lambda n: (0, 0, 0))
    else:
        # (Cout, Cin, K, K) -> (Cout, K*K*Cin) im2col layout, column index
        # (ky*K + kx)*Cin + ci (matches the slab build order).
        def to_layout(w):
            return jnp.transpose(w, (0, 2, 3, 1)).reshape(
                Cout, KSIZE * KSIZE * Cin).astype(cdt)
        w_spec = pl.BlockSpec((C, KSIZE * KSIZE * C), lambda n: (0, 0))

    w1c, w2c = to_layout(w1), to_layout(w2)
    b1c = b1.reshape(C, 1).astype(jnp.float32)
    b2c = b2.reshape(C, 1).astype(jnp.float32)

    # Column-validity masks for the flat shifts (hoisted out of the kernel).
    col = jnp.arange(RHW, dtype=jnp.int32) % W
    masks = jnp.stack(
        [((col + dx >= 0) & (col + dx < W)).astype(cdt) for dx in _MASK_SHIFTS],
        axis=0)                                              # (4, RH*W)

    # 128-aligned interior bases for the padded scratches.
    base1 = _round_up(PAD1 * (W + 1), 128)
    base2 = _round_up(PAD2 * (W + 1), 128)
    L1 = base1 + (H + PAD1) * W + PAD1
    L2 = base2 + (H + PAD2) * W + PAD2

    scratch = [pltpu.VMEM((C, L1), cdt),          # padded input
               pltpu.VMEM((C, L2), cdt)]          # padded intermediate
    if not per_tap:
        scratch.append(pltpu.VMEM((KSIZE * KSIZE * C, RHW), cdt))  # im2col slab

    kernel = functools.partial(_dblock_inv1_kernel, H=H, W=W, RH=RH,
                               base1=base1, base2=base2, per_tap=per_tap)

    out_flat = pl.pallas_call(
        kernel,
        out_shape=jax.ShapeDtypeStruct((N, C, HW), out_dtype),
        grid_spec=pltpu.PrefetchScalarGridSpec(
            num_scalar_prefetch=0,
            grid=(N,),
            in_specs=[
                pl.BlockSpec((1, C, HW), lambda n: (n, 0, 0)),
                w_spec,
                pl.BlockSpec((C, 1), lambda n: (0, 0)),
                w_spec,
                pl.BlockSpec((C, 1), lambda n: (0, 0)),
                pl.BlockSpec((len(_MASK_SHIFTS), RHW), lambda n: (0, 0)),
            ],
            out_specs=pl.BlockSpec((1, C, HW), lambda n: (n, 0, 0)),
            scratch_shapes=scratch,
        ),
        compiler_params=pltpu.CompilerParams(
            dimension_semantics=("parallel",),
            vmem_limit_bytes=_vmem_limit_bytes(),
        ),
        interpret=interpret,
    )(x_flat, w1c, b1c, w2c, b2c, masks)

    return out_flat.reshape(N, C, H, W)


def init_params(key, in_channels, out_channels, ksize):
    """Deterministic synthetic parameters (PyTorch weight layout)."""
    k1, k2, k3, k4 = jax.random.split(key, 4)
    fan_in = in_channels * ksize * ksize
    bound = 1.0 / jnp.sqrt(fan_in)
    w1 = jax.random.uniform(k1, (out_channels, in_channels, ksize, ksize),
                            jnp.float32, -bound, bound)
    b1 = jax.random.uniform(k2, (out_channels,), jnp.float32, -bound, bound)
    w2 = jax.random.uniform(k3, (out_channels, in_channels, ksize, ksize),
                            jnp.float32, -bound, bound)
    b2 = jax.random.uniform(k4, (out_channels,), jnp.float32, -bound, bound)
    return (w1, b1, w2, b2)


def _reference(x_nchw, params):
    """Pure-JAX reference (lax.conv_general_dilated) for correctness check."""
    w1, b1, w2, b2 = params
    dn = ("NCHW", "OIHW", "NCHW")
    y = jax.lax.conv_general_dilated(
        x_nchw, w1, window_strides=(1, 1),
        padding=((PAD1, PAD1), (PAD1, PAD1)),
        rhs_dilation=(DIL1, DIL1), dimension_numbers=dn)
    y = jnp.maximum(y + b1[None, :, None, None], 0.0)
    y = jax.lax.conv_general_dilated(
        y, w2, window_strides=(1, 1),
        padding=((PAD2, PAD2), (PAD2, PAD2)),
        rhs_dilation=(DIL2, DIL2), dimension_numbers=dn)
    y = jnp.maximum(y + b2[None, :, None, None], 0.0)
    return y


if __name__ == "__main__":
    key = jax.random.PRNGKey(0)
    kx, kp = jax.random.split(key)

    N, C, H, W = 2, 4, 16, 16
    x = jax.random.normal(kx, (N, C, H, W), jnp.float32)
    params = init_params(kp, in_channels=C, out_channels=C, ksize=KSIZE)

    ref = _reference(x, params)

    # f32 operands, default small-C deep-contraction path (single chunk).
    out_f32 = jax.block_until_ready(
        dblock_inv1(x, params, compute_dtype=jnp.float32))
    assert out_f32.shape == (N, C, H, W)
    assert jnp.allclose(out_f32, ref, atol=1e-4, rtol=1e-4), "f32 slab mismatch"

    # f32 operands, forced per-tap accumulation path + multi-chunk (2 x 8 rows):
    # exercises the slab-free path, the chunk loop and the column masks.
    out_pt = jax.block_until_ready(
        dblock_inv1(x, params, compute_dtype=jnp.float32,
                    row_chunk=8, per_tap=True))
    assert jnp.allclose(out_pt, ref, atol=1e-4, rtol=1e-4), "per-tap mismatch"

    # Default bf16 operands (f32 MXU accumulation): loose tolerance.
    out_bf16 = jax.block_until_ready(dblock_inv1(x, params))
    max_err = float(jnp.max(jnp.abs(out_bf16.astype(jnp.float32) - ref)))
    assert max_err < 0.1, f"bf16 mismatch: max abs err {max_err}"

    print("KERNEL_OK")
</pallas_src>

<mosaic_0001>
module attributes {stable_mosaic.version = 11 : i64} {
  func.func @_dblock_inv1_kernel(%arg0: i32, %arg1: memref<1x4x256xf32, #tpu.memory_space<vmem>>, %arg2: memref<4x36xf32, #tpu.memory_space<vmem>>, %arg3: memref<4x1xf32, #tpu.memory_space<vmem>>, %arg4: memref<4x36xf32, #tpu.memory_space<vmem>>, %arg5: memref<4x1xf32, #tpu.memory_space<vmem>>, %arg6: memref<4x256xf32, #tpu.memory_space<vmem>>, %arg7: memref<1x4x256xf32, #tpu.memory_space<vmem>>, %arg8: memref<4x418xf32, #tpu.memory_space<vmem>>, %arg9: memref<4x401xf32, #tpu.memory_space<vmem>>, %arg10: memref<36x256xf32, #tpu.memory_space<vmem>>) attributes {dimension_semantics = [#tpu.dimension_semantics<parallel>], iteration_bounds = array<i64: 2>, scalar_prefetch = 0 : i64, scratch_operands = 3 : i64, tpu.core_type = #tpu.core_type<tc>, window_params = [{transform_indices = @transform_0, window_bounds = array<i64: 1, 4, 256>}, {pipeline_mode = #tpu.pipeline_mode<synchronous>, transform_indices = @transform_1, window_bounds = array<i64: 4, 36>}, {pipeline_mode = #tpu.pipeline_mode<synchronous>, transform_indices = @transform_2, window_bounds = array<i64: 4, 1>}, {pipeline_mode = #tpu.pipeline_mode<synchronous>, transform_indices = @transform_3, window_bounds = array<i64: 4, 36>}, {pipeline_mode = #tpu.pipeline_mode<synchronous>, transform_indices = @transform_4, window_bounds = array<i64: 4, 1>}, {pipeline_mode = #tpu.pipeline_mode<synchronous>, transform_indices = @transform_5, window_bounds = array<i64: 4, 256>}, {transform_indices = @transform_6, window_bounds = array<i64: 1, 4, 256>}]} {
    %c0_i32 = arith.constant 0 : i32
    %0 = arith.cmpi eq, %arg0, %c0_i32 : i32
    %1 = arith.extui %0 : i1 to i32
    %c0_i32_0 = arith.constant 0 : i32
    %2 = arith.cmpi ne, %1, %c0_i32_0 : i32
    scf.if %2 {
      %cst_93 = arith.constant 0.000000e+00 : f32
      %100 = vector.broadcast %cst_93 : f32 to vector<4x128xf32>
      %c0_94 = arith.constant 0 : index
      %c0_95 = arith.constant 0 : index
      %101 = vector.load %arg8[%c0_94, %c0_95] : memref<4x418xf32, #tpu.memory_space<vmem>>, vector<4x128xf32>
      tpu.vector_store %arg8[%c0_94, %c0_95], %100 {strides = array<i32>} : memref<4x418xf32, #tpu.memory_space<vmem>>, vector<4x128xf32>,
      %cst_96 = arith.constant 0.000000e+00 : f32
      %102 = vector.broadcast %cst_96 : f32 to vector<4x34xf32>
      %c0_97 = arith.constant 0 : index
      %c384 = arith.constant 384 : index
      %103 = vector.load %arg8[%c0_97, %c384] : memref<4x418xf32, #tpu.memory_space<vmem>>, vector<4x34xf32>
      tpu.vector_store %arg8[%c0_97, %c384], %102 {strides = array<i32>} : memref<4x418xf32, #tpu.memory_space<vmem>>, vector<4x34xf32>,
      %cst_98 = arith.constant 0.000000e+00 : f32
      %104 = vector.broadcast %cst_98 : f32 to vector<4x128xf32>
      %c0_99 = arith.constant 0 : index
      %c0_100 = arith.constant 0 : index
      %105 = vector.load %arg9[%c0_99, %c0_100] : memref<4x401xf32, #tpu.memory_space<vmem>>, vector<4x128xf32>
      tpu.vector_store %arg9[%c0_99, %c0_100], %104 {strides = array<i32>} : memref<4x401xf32, #tpu.memory_space<vmem>>, vector<4x128xf32>,
      %cst_101 = arith.constant 0.000000e+00 : f32
      %106 = vector.broadcast %cst_101 : f32 to vector<4x17xf32>
      %c0_102 = arith.constant 0 : index
      %c384_103 = arith.constant 384 : index
      %107 = vector.load %arg9[%c0_102, %c384_103] : memref<4x401xf32, #tpu.memory_space<vmem>>, vector<4x17xf32>
      tpu.vector_store %arg9[%c0_102, %c384_103], %106 {strides = array<i32>} : memref<4x401xf32, #tpu.memory_space<vmem>>, vector<4x17xf32>,
    } else {
    }
    %c0 = arith.constant 0 : index
    %c0_1 = arith.constant 0 : index
    %c0_2 = arith.constant 0 : index
    %3 = vector.load %arg1[%c0, %c0_1, %c0_2] : memref<1x4x256xf32, #tpu.memory_space<vmem>>, vector<1x4x256xf32>
    %4 = vector.shape_cast %3 : vector<1x4x256xf32> to vector<4x256xf32>
    %c0_3 = arith.constant 0 : index
    %c128 = arith.constant 128 : index
    %5 = vector.load %arg8[%c0_3, %c128] : memref<4x418xf32, #tpu.memory_space<vmem>>, vector<4x256xf32>
    tpu.vector_store %arg8[%c0_3, %c128], %4 {strides = array<i32>} : memref<4x418xf32, #tpu.memory_space<vmem>>, vector<4x256xf32>,
    %c0_4 = arith.constant 0 : index
    %c0_5 = arith.constant 0 : index
    %6 = vector.load %arg3[%c0_4, %c0_5] : memref<4x1xf32, #tpu.memory_space<vmem>>, vector<4x1xf32>
    %7 = vector.shape_cast %6 : vector<4x1xf32> to vector<4x1xf32>
    %8 = vector.broadcast %7 : vector<4x1xf32> to vector<4x256xf32>
    %c0_6 = arith.constant 0 : index
    %c0_7 = arith.constant 0 : index
    %9 = vector.load %arg5[%c0_6, %c0_7] : memref<4x1xf32, #tpu.memory_space<vmem>>, vector<4x1xf32>
    %10 = vector.shape_cast %9 : vector<4x1xf32> to vector<4x1xf32>
    %11 = vector.broadcast %10 : vector<4x1xf32> to vector<4x256xf32>
    %c0_8 = arith.constant 0 : index
    %c94 = arith.constant 94 : index
    %12 = vector.load %arg8[%c0_8, %c94] : memref<4x418xf32, #tpu.memory_space<vmem>>, vector<4x256xf32>
    %c0_9 = arith.constant 0 : index
    %c0_10 = arith.constant 0 : index
    %13 = vector.load %arg6[%c0_9, %c0_10] : memref<4x256xf32, #tpu.memory_space<vmem>>, vector<1x256xf32>
    %14 = vector.broadcast %13 : vector<1x256xf32> to vector<4x256xf32>
    %15 = arith.mulf %12, %14 : vector<4x256xf32>
    %c0_11 = arith.constant 0 : index
    %c0_12 = arith.constant 0 : index
    %16 = vector.load %arg10[%c0_11, %c0_12] : memref<36x256xf32, #tpu.memory_space<vmem>>, vector<4x256xf32>
    tpu.vector_store %arg10[%c0_11, %c0_12], %15 {strides = array<i32>} : memref<36x256xf32, #tpu.memory_space<vmem>>, vector<4x256xf32>,
    %c0_13 = arith.constant 0 : index
    %c96 = arith.constant 96 : index
    %17 = vector.load %arg8[%c0_13, %c96] : memref<4x418xf32, #tpu.memory_space<vmem>>, vector<4x256xf32>
    %c4 = arith.constant 4 : index
    %c0_14 = arith.constant 0 : index
    %18 = vector.load %arg10[%c4, %c0_14] : memref<36x256xf32, #tpu.memory_space<vmem>>, vector<4x256xf32>
    tpu.vector_store %arg10[%c4, %c0_14], %17 {strides = array<i32>} : memref<36x256xf32, #tpu.memory_space<vmem>>, vector<4x256xf32>,
    %c0_15 = arith.constant 0 : index
    %c98 = arith.constant 98 : index
    %19 = vector.load %arg8[%c0_15, %c98] : memref<4x418xf32, #tpu.memory_space<vmem>>, vector<4x256xf32>
    %c3 = arith.constant 3 : index
    %c0_16 = arith.constant 0 : index
    %20 = vector.load %arg6[%c3, %c0_16] : memref<4x256xf32, #tpu.memory_space<vmem>>, vector<1x256xf32>
    %21 = vector.broadcast %20 : vector<1x256xf32> to vector<4x256xf32>
    %22 = arith.mulf %19, %21 : vector<4x256xf32>
    %c8 = arith.constant 8 : index
    %c0_17 = arith.constant 0 : index
    %23 = vector.load %arg10[%c8, %c0_17] : memref<36x256xf32, #tpu.memory_space<vmem>>, vector<4x256xf32>
    tpu.vector_store %arg10[%c8, %c0_17], %22 {strides = array<i32>} : memref<36x256xf32, #tpu.memory_space<vmem>>, vector<4x256xf32>,
    %c0_18 = arith.constant 0 : index
    %c126 = arith.constant 126 : index
    %24 = vector.load %arg8[%c0_18, %c126] : memref<4x418xf32, #tpu.memory_space<vmem>>, vector<4x256xf32>
    %c0_19 = arith.constant 0 : index
    %c0_20 = arith.constant 0 : index
    %25 = vector.load %arg6[%c0_19, %c0_20] : memref<4x256xf32, #tpu.memory_space<vmem>>, vector<1x256xf32>
    %26 = vector.broadcast %25 : vector<1x256xf32> to vector<4x256xf32>
    %27 = arith.mulf %24, %26 : vector<4x256xf32>
    %c12 = arith.constant 12 : index
    %c0_21 = arith.constant 0 : index
    %28 = vector.load %arg10[%c12, %c0_21] : memref<36x256xf32, #tpu.memory_space<vmem>>, vector<4x256xf32>
    tpu.vector_store %arg10[%c12, %c0_21], %27 {strides = array<i32>} : memref<36x256xf32, #tpu.memory_space<vmem>>, vector<4x256xf32>,
    %c0_22 = arith.constant 0 : index
    %c128_23 = arith.constant 128 : index
    %29 = vector.load %arg8[%c0_22, %c128_23] : memref<4x418xf32, #tpu.memory_space<vmem>>, vector<4x256xf32>
    %c16 = arith.constant 16 : index
    %c0_24 = arith.constant 0 : index
    %30 = vector.load %arg10[%c16, %c0_24] : memref<36x256xf32, #tpu.memory_space<vmem>>, vector<4x256xf32>
    tpu.vector_store %arg10[%c16, %c0_24], %29 {strides = array<i32>} : memref<36x256xf32, #tpu.memory_space<vmem>>, vector<4x256xf32>,
    %c0_25 = arith.constant 0 : index
    %c130 = arith.constant 130 : index
    %31 = vector.load %arg8[%c0_25, %c130] : memref<4x418xf32, #tpu.memory_space<vmem>>, vector<4x256xf32>
    %c3_26 = arith.constant 3 : index
    %c0_27 = arith.constant 0 : index
    %32 = vector.load %arg6[%c3_26, %c0_27] : memref<4x256xf32, #tpu.memory_space<vmem>>, vector<1x256xf32>
    %33 = vector.broadcast %32 : vector<1x256xf32> to vector<4x256xf32>
    %34 = arith.mulf %31, %33 : vector<4x256xf32>
    %c20 = arith.constant 20 : index
    %c0_28 = arith.constant 0 : index
    %35 = vector.load %arg10[%c20, %c0_28] : memref<36x256xf32, #tpu.memory_space<vmem>>, vector<4x256xf32>
    tpu.vector_store %arg10[%c20, %c0_28], %34 {strides = array<i32>} : memref<36x256xf32, #tpu.memory_space<vmem>>, vector<4x256xf32>,
    %c0_29 = arith.constant 0 : index
    %c158 = arith.constant 158 : index
    %36 = vector.load %arg8[%c0_29, %c158] : memref<4x418xf32, #tpu.memory_space<vmem>>, vector<4x256xf32>
    %c0_30 = arith.constant 0 : index
    %c0_31 = arith.constant 0 : index
    %37 = vector.load %arg6[%c0_30, %c0_31] : memref<4x256xf32, #tpu.memory_space<vmem>>, vector<1x256xf32>
    %38 = vector.broadcast %37 : vector<1x256xf32> to vector<4x256xf32>
    %39 = arith.mulf %36, %38 : vector<4x256xf32>
    %c24 = arith.constant 24 : index
    %c0_32 = arith.constant 0 : index
    %40 = vector.load %arg10[%c24, %c0_32] : memref<36x256xf32, #tpu.memory_space<vmem>>, vector<4x256xf32>
    tpu.vector_store %arg10[%c24, %c0_32], %39 {strides = array<i32>} : memref<36x256xf32, #tpu.memory_space<vmem>>, vector<4x256xf32>,
    %c0_33 = arith.constant 0 : index
    %c160 = arith.constant 160 : index
    %41 = vector.load %arg8[%c0_33, %c160] : memref<4x418xf32, #tpu.memory_space<vmem>>, vector<4x256xf32>
    %c28 = arith.constant 28 : index
    %c0_34 = arith.constant 0 : index
    %42 = vector.load %arg10[%c28, %c0_34] : memref<36x256xf32, #tpu.memory_space<vmem>>, vector<4x256xf32>
    tpu.vector_store %arg10[%c28, %c0_34], %41 {strides = array<i32>} : memref<36x256xf32, #tpu.memory_space<vmem>>, vector<4x256xf32>,
    %c0_35 = arith.constant 0 : index
    %c162 = arith.constant 162 : index
    %43 = vector.load %arg8[%c0_35, %c162] : memref<4x418xf32, #tpu.memory_space<vmem>>, vector<4x256xf32>
    %c3_36 = arith.constant 3 : index
    %c0_37 = arith.constant 0 : index
    %44 = vector.load %arg6[%c3_36, %c0_37] : memref<4x256xf32, #tpu.memory_space<vmem>>, vector<1x256xf32>
    %45 = vector.broadcast %44 : vector<1x256xf32> to vector<4x256xf32>
    %46 = arith.mulf %43, %45 : vector<4x256xf32>
    %c32 = arith.constant 32 : index
    %c0_38 = arith.constant 0 : index
    %47 = vector.load %arg10[%c32, %c0_38] : memref<36x256xf32, #tpu.memory_space<vmem>>, vector<4x256xf32>
    tpu.vector_store %arg10[%c32, %c0_38], %46 {strides = array<i32>} : memref<36x256xf32, #tpu.memory_space<vmem>>, vector<4x256xf32>,
    %c0_39 = arith.constant 0 : index
    %c0_40 = arith.constant 0 : index
    %48 = vector.load %arg2[%c0_39, %c0_40] : memref<4x36xf32, #tpu.memory_space<vmem>>, vector<4x36xf32>
    %c0_41 = arith.constant 0 : index
    %c0_42 = arith.constant 0 : index
    %49 = vector.load %arg10[%c0_41, %c0_42] : memref<36x256xf32, #tpu.memory_space<vmem>>, vector<36x256xf32>
    %cst = arith.constant dense<0.000000e+00> : vector<4x256xf32>
    %50 = tpu.matmul %48, %49, %cst {dimension_numbers = #tpu.dot_dimension_numbers<[1], [0], [0], [1], [0, 0, 1, 1], [], []>} : vector<4x36xf32>, vector<36x256xf32>, vector<4x256xf32> -> vector<4x256xf32>
    %51 = arith.addf %50, %8 : vector<4x256xf32>
    %cst_43 = arith.constant 0.000000e+00 : f32
    %52 = vector.broadcast %cst_43 : f32 to vector<4x256xf32>
    %53 = arith.maximumf %51, %52 : vector<4x256xf32>
    %c0_44 = arith.constant 0 : index
    %c128_45 = arith.constant 128 : index
    %54 = vector.load %arg9[%c0_44, %c128_45] : memref<4x401xf32, #tpu.memory_space<vmem>>, vector<4x256xf32>
    tpu.vector_store %arg9[%c0_44, %c128_45], %53 {strides = array<i32>} : memref<4x401xf32, #tpu.memory_space<vmem>>, vector<4x256xf32>,
    %c0_46 = arith.constant 0 : index
    %c111 = arith.constant 111 : index
    %55 = vector.load %arg9[%c0_46, %c111] : memref<4x401xf32, #tpu.memory_space<vmem>>, vector<4x256xf32>
    %c1 = arith.constant 1 : index
    %c0_47 = arith.constant 0 : index
    %56 = vector.load %arg6[%c1, %c0_47] : memref<4x256xf32, #tpu.memory_space<vmem>>, vector<1x256xf32>
    %57 = vector.broadcast %56 : vector<1x256xf32> to vector<4x256xf32>
    %58 = arith.mulf %55, %57 : vector<4x256xf32>
    %c0_48 = arith.constant 0 : index
    %c0_49 = arith.constant 0 : index
    %59 = vector.load %arg10[%c0_48, %c0_49] : memref<36x256xf32, #tpu.memory_space<vmem>>, vector<4x256xf32>
    tpu.vector_store %arg10[%c0_48, %c0_49], %58 {strides = array<i32>} : memref<36x256xf32, #tpu.memory_space<vmem>>, vector<4x256xf32>,
    %c0_50 = arith.constant 0 : index
    %c112 = arith.constant 112 : index
    %60 = vector.load %arg9[%c0_50, %c112] : memref<4x401xf32, #tpu.memory_space<vmem>>, vector<4x256xf32>
    %c4_51 = arith.constant 4 : index
    %c0_52 = arith.constant 0 : index
    %61 = vector.load %arg10[%c4_51, %c0_52] : memref<36x256xf32, #tpu.memory_space<vmem>>, vector<4x256xf32>
    tpu.vector_store %arg10[%c4_51, %c0_52], %60 {strides = array<i32>} : memref<36x256xf32, #tpu.memory_space<vmem>>, vector<4x256xf32>,
    %c0_53 = arith.constant 0 : index
    %c113 = arith.constant 113 : index
    %62 = vector.load %arg9[%c0_53, %c113] : memref<4x401xf32, #tpu.memory_space<vmem>>, vector<4x256xf32>
    %c2 = arith.constant 2 : index
    %c0_54 = arith.constant 0 : index
    %63 = vector.load %arg6[%c2, %c0_54] : memref<4x256xf32, #tpu.memory_space<vmem>>, vector<1x256xf32>
    %64 = vector.broadcast %63 : vector<1x256xf32> to vector<4x256xf32>
    %65 = arith.mulf %62, %64 : vector<4x256xf32>
    %c8_55 = arith.constant 8 : index
    %c0_56 = arith.constant 0 : index
    %66 = vector.load %arg10[%c8_55, %c0_56] : memref<36x256xf32, #tpu.memory_space<vmem>>, vector<4x256xf32>
    tpu.vector_store %arg10[%c8_55, %c0_56], %65 {strides = array<i32>} : memref<36x256xf32, #tpu.memory_space<vmem>>, vector<4x256xf32>,
    %c0_57 = arith.constant 0 : index
    %c127 = arith.constant 127 : index
    %67 = vector.load %arg9[%c0_57, %c127] : memref<4x401xf32, #tpu.memory_space<vmem>>, vector<4x256xf32>
    %c1_58 = arith.constant 1 : index
    %c0_59 = arith.constant 0 : index
    %68 = vector.load %arg6[%c1_58, %c0_59] : memref<4x256xf32, #tpu.memory_space<vmem>>, vector<1x256xf32>
    %69 = vector.broadcast %68 : vector<1x256xf32> to vector<4x256xf32>
    %70 = arith.mulf %67, %69 : vector<4x256xf32>
    %c12_60 = arith.constant 12 : index
    %c0_61 = arith.constant 0 : index
    %71 = vector.load %arg10[%c12_60, %c0_61] : memref<36x256xf32, #tpu.memory_space<vmem>>, vector<4x256xf32>
    tpu.vector_store %arg10[%c12_60, %c0_61], %70 {strides = array<i32>} : memref<36x256xf32, #tpu.memory_space<vmem>>, vector<4x256xf32>,
    %c0_62 = arith.constant 0 : index
    %c128_63 = arith.constant 128 : index
    %72 = vector.load %arg9[%c0_62, %c128_63] : memref<4x401xf32, #tpu.memory_space<vmem>>, vector<4x256xf32>
    %c16_64 = arith.constant 16 : index
    %c0_65 = arith.constant 0 : index
    %73 = vector.load %arg10[%c16_64, %c0_65] : memref<36x256xf32, #tpu.memory_space<vmem>>, vector<4x256xf32>
    tpu.vector_store %arg10[%c16_64, %c0_65], %72 {strides = array<i32>} : memref<36x256xf32, #tpu.memory_space<vmem>>, vector<4x256xf32>,
    %c0_66 = arith.constant 0 : index
    %c129 = arith.constant 129 : index
    %74 = vector.load %arg9[%c0_66, %c129] : memref<4x401xf32, #tpu.memory_space<vmem>>, vector<4x256xf32>
    %c2_67 = arith.constant 2 : index
    %c0_68 = arith.constant 0 : index
    %75 = vector.load %arg6[%c2_67, %c0_68] : memref<4x256xf32, #tpu.memory_space<vmem>>, vector<1x256xf32>
    %76 = vector.broadcast %75 : vector<1x256xf32> to vector<4x256xf32>
    %77 = arith.mulf %74, %76 : vector<4x256xf32>
    %c20_69 = arith.constant 20 : index
    %c0_70 = arith.constant 0 : index
    %78 = vector.load %arg10[%c20_69, %c0_70] : memref<36x256xf32, #tpu.memory_space<vmem>>, vector<4x256xf32>
    tpu.vector_store %arg10[%c20_69, %c0_70], %77 {strides = array<i32>} : memref<36x256xf32, #tpu.memory_space<vmem>>, vector<4x256xf32>,
    %c0_71 = arith.constant 0 : index
    %c143 = arith.constant 143 : index
    %79 = vector.load %arg9[%c0_71, %c143] : memref<4x401xf32, #tpu.memory_space<vmem>>, vector<4x256xf32>
    %c1_72 = arith.constant 1 : index
    %c0_73 = arith.constant 0 : index
    %80 = vector.load %arg6[%c1_72, %c0_73] : memref<4x256xf32, #tpu.memory_space<vmem>>, vector<1x256xf32>
    %81 = vector.broadcast %80 : vector<1x256xf32> to vector<4x256xf32>
    %82 = arith.mulf %79, %81 : vector<4x256xf32>
    %c24_74 = arith.constant 24 : index
    %c0_75 = arith.constant 0 : index
    %83 = vector.load %arg10[%c24_74, %c0_75] : memref<36x256xf32, #tpu.memory_space<vmem>>, vector<4x256xf32>
    tpu.vector_store %arg10[%c24_74, %c0_75], %82 {strides = array<i32>} : memref<36x256xf32, #tpu.memory_space<vmem>>, vector<4x256xf32>,
    %c0_76 = arith.constant 0 : index
    %c144 = arith.constant 144 : index
    %84 = vector.load %arg9[%c0_76, %c144] : memref<4x401xf32, #tpu.memory_space<vmem>>, vector<4x256xf32>
    %c28_77 = arith.constant 28 : index
    %c0_78 = arith.constant 0 : index
    %85 = vector.load %arg10[%c28_77, %c0_78] : memref<36x256xf32, #tpu.memory_space<vmem>>, vector<4x256xf32>
    tpu.vector_store %arg10[%c28_77, %c0_78], %84 {strides = array<i32>} : memref<36x256xf32, #tpu.memory_space<vmem>>, vector<4x256xf32>,
    %c0_79 = arith.constant 0 : index
    %c145 = arith.constant 145 : index
    %86 = vector.load %arg9[%c0_79, %c145] : memref<4x401xf32, #tpu.memory_space<vmem>>, vector<4x256xf32>
    %c2_80 = arith.constant 2 : index
    %c0_81 = arith.constant 0 : index
    %87 = vector.load %arg6[%c2_80, %c0_81] : memref<4x256xf32, #tpu.memory_space<vmem>>, vector<1x256xf32>
    %88 = vector.broadcast %87 : vector<1x256xf32> to vector<4x256xf32>
    %89 = arith.mulf %86, %88 : vector<4x256xf32>
    %c32_82 = arith.constant 32 : index
    %c0_83 = arith.constant 0 : index
    %90 = vector.load %arg10[%c32_82, %c0_83] : memref<36x256xf32, #tpu.memory_space<vmem>>, vector<4x256xf32>
    tpu.vector_store %arg10[%c32_82, %c0_83], %89 {strides = array<i32>} : memref<36x256xf32, #tpu.memory_space<vmem>>, vector<4x256xf32>,
    %c0_84 = arith.constant 0 : index
    %c0_85 = arith.constant 0 : index
    %91 = vector.load %arg4[%c0_84, %c0_85] : memref<4x36xf32, #tpu.memory_space<vmem>>, vector<4x36xf32>
    %c0_86 = arith.constant 0 : index
    %c0_87 = arith.constant 0 : index
    %92 = vector.load %arg10[%c0_86, %c0_87] : memref<36x256xf32, #tpu.memory_space<vmem>>, vector<36x256xf32>
    %cst_88 = arith.constant dense<0.000000e+00> : vector<4x256xf32>
    %93 = tpu.matmul %91, %92, %cst_88 {dimension_numbers = #tpu.dot_dimension_numbers<[1], [0], [0], [1], [0, 0, 1, 1], [], []>} : vector<4x36xf32>, vector<36x256xf32>, vector<4x256xf32> -> vector<4x256xf32>
    %94 = arith.addf %93, %11 : vector<4x256xf32>
    %cst_89 = arith.constant 0.000000e+00 : f32
    %95 = vector.broadcast %cst_89 : f32 to vector<4x256xf32>
    %96 = arith.maximumf %94, %95 : vector<4x256xf32>
    %c0_90 = arith.constant 0 : index
    %c0_91 = arith.constant 0 : index
    %c0_92 = arith.constant 0 : index
    %97 = vector.load %arg7[%c0_90, %c0_91, %c0_92] : memref<1x4x256xf32, #tpu.memory_space<vmem>>, vector<1x4x256xf32>
    %98 = vector.shape_cast %97 : vector<1x4x256xf32> to vector<4x256xf32>
    %99 = vector.shape_cast %96 : vector<4x256xf32> to vector<1x4x256xf32>
    tpu.vector_store %arg7[%c0_90, %c0_91, %c0_92], %99 {strides = array<i32>} : memref<1x4x256xf32, #tpu.memory_space<vmem>>, vector<1x4x256xf32>,
    return
  }
  func.func @transform_0(%arg0: i32) -> (i32, i32, i32) {
    %c0_i32 = arith.constant 0 : i32
    %c0_i32_0 = arith.constant 0 : i32
    %c0_i32_1 = arith.constant 0 : i32
    return %arg0, %c0_i32, %c0_i32_0 : i32, i32, i32
  }
  func.func @transform_1(%arg0: i32) -> (i32, i32) {
    %c0_i32 = arith.constant 0 : i32
    %c0_i32_0 = arith.constant 0 : i32
    %c0_i32_1 = arith.constant 0 : i32
    return %c0_i32, %c0_i32_0 : i32, i32
  }
  func.func @transform_2(%arg0: i32) -> (i32, i32) {
    %c0_i32 = arith.constant 0 : i32
    %c0_i32_0 = arith.constant 0 : i32
    %c0_i32_1 = arith.constant 0 : i32
    return %c0_i32, %c0_i32_0 : i32, i32
  }
  func.func @transform_3(%arg0: i32) -> (i32, i32) {
    %c0_i32 = arith.constant 0 : i32
    %c0_i32_0 = arith.constant 0 : i32
    %c0_i32_1 = arith.constant 0 : i32
    return %c0_i32, %c0_i32_0 : i32, i32
  }
  func.func @transform_4(%arg0: i32) -> (i32, i32) {
    %c0_i32 = arith.constant 0 : i32
    %c0_i32_0 = arith.constant 0 : i32
    %c0_i32_1 = arith.constant 0 : i32
    return %c0_i32, %c0_i32_0 : i32, i32
  }
  func.func @transform_5(%arg0: i32) -> (i32, i32) {
    %c0_i32 = arith.constant 0 : i32
    %c0_i32_0 = arith.constant 0 : i32
    %c0_i32_1 = arith.constant 0 : i32
    return %c0_i32, %c0_i32_0 : i32, i32
  }
  func.func @transform_6(%arg0: i32) -> (i32, i32, i32) {
    %c0_i32 = arith.constant 0 : i32
    %c0_i32_0 = arith.constant 0 : i32
    %c0_i32_1 = arith.constant 0 : i32
    return %arg0, %c0_i32, %c0_i32_0 : i32, i32, i32
  }
}

</mosaic_0001>

<llo_original>
// kernel: tpu_custom_call.1
$region0: #{tpu_custom_call.1}
  #allocation0 [shape = 'u32[]', space=smem, size = 0x4, offset = 0x4, fixed_abs, tag = 'smem constant byte address 0x4 - core index']
  #allocation1 [shape = 'u32[72,128]{1,0:T(1,128)}', space=vmem, size = 0x9000, scoped, tag = 'internal scratch']
  #allocation2 [shape = 'f32[4,418]{1,0:T(4,128)}', space=vmem, size = 0x2000, scoped, tag = 'scratch operand']
  #allocation3 [shape = 'f32[4,401]{1,0:T(4,128)}', space=vmem, size = 0x2000, scoped, tag = 'scratch operand']
  #allocation4 [shape = 'f32[36,256]{1,0:T(8,128)}', space=vmem, size = 0xa000, scoped, tag = 'scratch operand']
  %s0 = inlined_call_operand.hbm [shape: f32[2,4,256], index: 0, kind: input, shape index: {}]
  %s1 = inlined_call_operand.hbm [shape: f32[4,36], index: 1, kind: input, shape index: {}]
  %s2 = inlined_call_operand.vmem [shape: f32[4,1], index: 2, kind: input, shape index: {}]
  %s3 = inlined_call_operand.hbm [shape: f32[4,36], index: 3, kind: input, shape index: {}]
  %s4 = inlined_call_operand.vmem [shape: f32[4,1], index: 4, kind: input, shape index: {}]
  %s5 = inlined_call_operand.vmem [shape: f32[4,256], index: 5, kind: input, shape index: {}]
  %s6 = inlined_call_operand.hbm [shape: f32[2,4,256], index: 6, kind: output, shape index: {}]
  %s7 = sld [smem:[#allocation0]]
  $region73: #{tpu_custom_call.1} parent=0
    _
  %s9 = ssub.s32 1, %s7
  %s10 = scalar_select 0, %s9, %s7
  $region1: #{tpu_custom_call.1} parent=0
    #allocation5 [shape = 'u8[8192]{0}', space=vmem, size = 0x2000, scoped, tag = 'input window, operand 0']
    #allocation6 [shape = 's32[2]{0}', space=sflag, size = 0x8, scoped, tag = 'scoped memory for tpu_custom_call.1']
    #allocation7 [shape = 's32[2]{0}', space=sflag, size = 0x8, scoped, tag = 'scoped memory for tpu_custom_call.1']
    #allocation8 [shape = 'u8[2048]{0}', space=vmem, size = 0x800, scoped, tag = 'input window, operand 1, single buffered']
    #allocation9 [shape = 's32[1]{0}', space=sflag, size = 0x4, scoped, tag = 'scoped memory for tpu_custom_call.1']
    #allocation10 [shape = 'u8[2048]{0}', space=vmem, size = 0x800, scoped, tag = 'input window, operand 3, single buffered']
    #allocation11 [shape = 'u8[8192]{0}', space=vmem, size = 0x2000, scoped, tag = 'output window, operand 0']
    %11 = vsyncpa [#allocation6], 0
    %s12 = scalar_lea.sflag [#allocation6], 1
    %13 = vsyncpa %s12, 0
    %14 = vsyncpa [#allocation9], 0
    %15 = vsyncpa [#allocation7], 0
    %s16 = scalar_lea.sflag [#allocation7], 1
    %17 = vsyncpa %s16, 0
    loop: start=0, step=1, limit=4
    $region2: #{tpu_custom_call.1} parent=1 // loop_pre_header
      _
    $region3: #{tpu_custom_call.1} parent=1 // loop_header
      %s19 = sphi 0, %s23
      %p20 = scmp.ge.s32.totalorder %s19, 4
      %s29 = sphi 0, %s31
      %s32 = sphi 0, %s29
      %s33 = sphi 0, %s32
      %s49 = sphi 0, %s33
      %s53 = sphi 0, %s53
      %s55 = sphi 0, %s53
      %s56 = sphi 0, %s55
      %s70 = sphi 0, %s56
      %s74 = sphi 0, %s74
      %s76 = sphi 0, %s74
      %s77 = sphi 0, %s76
      %s91 = sphi 0, %s77
      %s95 = sphi 0, %s95
      %s97 = sphi 0, %s95
      %s98 = sphi 0, %s97
      %s112 = sphi 0, %s98
      %s116 = sphi 0, %s116
      %s118 = sphi 0, %s116
      %s119 = sphi 0, %s118
      %s133 = sphi 0, %s119
      %s137 = sphi 0, %s137
      %s139 = sphi 0, %s137
      %s140 = sphi 0, %s139
      %s154 = sphi 0, %s140
      %s160 = sphi 0, %s162
      %s163 = sphi 0, %s160
      %s164 = sphi 0, %s163
      %s180 = sphi 0, %s164
    $region4: #{tpu_custom_call.1} parent=1 // loop_header_branch
      %22 = sbr.rel (%p20) target = $region8
    $region5: #{tpu_custom_call.1} parent=1 // loop_body
      %s24 = ssub.s32 %s19, 1
      %s25 = ssub.s32 %s19, 2
      %s26 = sadd.s32 %s19, 1
      %s27 = ssub.s32 %s19, %s26
      %p28 = scmp.eq.s32.totalorder %s27, 0
      %s30 = sadd.s32 %s29, 1
      %s31 = scalar_select %p28, %s29, %s30
      %p34 = pneg %p28
      %p35 = scmp.eq.s32.totalorder %s19, 1
      %p36 = por %p34, %p35
      %p37 = scmp.ne.s32.totalorder %s29, %s32
      %p38 = scmp.eq.s32.totalorder %s19, 0
      %p39 = por %p37, %p38
      %p40 = scmp.ne.s32.totalorder %s29, %s32
      %p41 = scmp.eq.s32.totalorder %s24, 1
      %p42 = por %p40, %p41
      %p43 = scmp.ne.s32.totalorder %s32, %s33
      %p44 = scmp.eq.s32.totalorder %s24, 0
      %p45 = por %p43, %p44
      %p46 = scmp.ne.s32.totalorder %s32, %s33
      %p47 = scmp.eq.s32.totalorder %s25, 1
      %p48 = por %p46, %p47
      %p50 = scmp.ne.s32.totalorder %s33, %s49
      %p51 = scmp.eq.s32.totalorder %s25, 0
      %p52 = por %p50, %p51
      %s54 = sadd.s32 %s53, 1
      %p57 = scmp.eq.s32.totalorder %s19, 1
      %p58 = scmp.ne.s32.totalorder %s53, %s55
      %p59 = scmp.eq.s32.totalorder %s19, 0
      %p60 = por %p58, %p59
      %p61 = scmp.ne.s32.totalorder %s53, %s55
      %p62 = scmp.eq.s32.totalorder %s24, 1
      %p63 = por %p61, %p62
      %p64 = scmp.ne.s32.totalorder %s55, %s56
      %p65 = scmp.eq.s32.totalorder %s24, 0
      %p66 = por %p64, %p65
      %p67 = scmp.ne.s32.totalorder %s55, %s56
      %p68 = scmp.eq.s32.totalorder %s25, 1
      %p69 = por %p67, %p68
      %p71 = scmp.ne.s32.totalorder %s56, %s70
      %p72 = scmp.eq.s32.totalorder %s25, 0
      %p73 = por %p71, %p72
      %s75 = sadd.s32 %s74, 1
      %p78 = scmp.eq.s32.totalorder %s19, 1
      %p79 = scmp.ne.s32.totalorder %s74, %s76
      %p80 = scmp.eq.s32.totalorder %s19, 0
      %p81 = por %p79, %p80
      %p82 = scmp.ne.s32.totalorder %s74, %s76
      %p83 = scmp.eq.s32.totalorder %s24, 1
      %p84 = por %p82, %p83
      %p85 = scmp.ne.s32.totalorder %s76, %s77
      %p86 = scmp.eq.s32.totalorder %s24, 0
      %p87 = por %p85, %p86
      %p88 = scmp.ne.s32.totalorder %s76, %s77
      %p89 = scmp.eq.s32.totalorder %s25, 1
      %p90 = por %p88, %p89
      %p92 = scmp.ne.s32.totalorder %s77, %s91
      %p93 = scmp.eq.s32.totalorder %s25, 0
      %p94 = por %p92, %p93
      %s96 = sadd.s32 %s95, 1
      %p99 = scmp.eq.s32.totalorder %s19, 1
      %p100 = scmp.ne.s32.totalorder %s95, %s97
      %p101 = scmp.eq.s32.totalorder %s19, 0
      %p102 = por %p100, %p101
      %p103 = scmp.ne.s32.totalorder %s95, %s97
      %p104 = scmp.eq.s32.totalorder %s24, 1
      %p105 = por %p103, %p104
      %p106 = scmp.ne.s32.totalorder %s97, %s98
      %p107 = scmp.eq.s32.totalorder %s24, 0
      %p108 = por %p106, %p107
      %p109 = scmp.ne.s32.totalorder %s97, %s98
      %p110 = scmp.eq.s32.totalorder %s25, 1
      %p111 = por %p109, %p110
      %p113 = scmp.ne.s32.totalorder %s98, %s112
      %p114 = scmp.eq.s32.totalorder %s25, 0
      %p115 = por %p113, %p114
      %s117 = sadd.s32 %s116, 1
      %p120 = scmp.eq.s32.totalorder %s19, 1
      %p121 = scmp.ne.s32.totalorder %s116, %s118
      %p122 = scmp.eq.s32.totalorder %s19, 0
      %p123 = por %p121, %p122
      %p124 = scmp.ne.s32.totalorder %s116, %s118
      %p125 = scmp.eq.s32.totalorder %s24, 1
      %p126 = por %p124, %p125
      %p127 = scmp.ne.s32.totalorder %s118, %s119
      %p128 = scmp.eq.s32.totalorder %s24, 0
      %p129 = por %p127, %p128
      %p130 = scmp.ne.s32.totalorder %s118, %s119
      %p131 = scmp.eq.s32.totalorder %s25, 1
      %p132 = por %p130, %p131
      %p134 = scmp.ne.s32.totalorder %s119, %s133
      %p135 = scmp.eq.s32.totalorder %s25, 0
      %p136 = por %p134, %p135
      %s138 = sadd.s32 %s137, 1
      %p141 = scmp.eq.s32.totalorder %s19, 1
      %p142 = scmp.ne.s32.totalorder %s137, %s139
      %p143 = scmp.eq.s32.totalorder %s19, 0
      %p144 = por %p142, %p143
      %p145 = scmp.ne.s32.totalorder %s137, %s139
      %p146 = scmp.eq.s32.totalorder %s24, 1
      %p147 = por %p145, %p146
      %p148 = scmp.ne.s32.totalorder %s139, %s140
      %p149 = scmp.eq.s32.totalorder %s24, 0
      %p150 = por %p148, %p149
      %p151 = scmp.ne.s32.totalorder %s139, %s140
      %p152 = scmp.eq.s32.totalorder %s25, 1
      %p153 = por %p151, %p152
      %p155 = scmp.ne.s32.totalorder %s140, %s154
      %p156 = scmp.eq.s32.totalorder %s25, 0
      %p157 = por %p155, %p156
      %s158 = ssub.s32 %s19, %s26
      %p159 = scmp.eq.s32.totalorder %s158, 0
      %s161 = sadd.s32 %s160, 1
      %s162 = scalar_select %p159, %s160, %s161
      %p165 = pneg %p159
      %p166 = scmp.eq.s32.totalorder %s19, 1
      %p167 = por %p165, %p166
      %p168 = scmp.ne.s32.totalorder %s160, %s163
      %p169 = scmp.eq.s32.totalorder %s19, 0
      %p170 = por %p168, %p169
      %p171 = scmp.ne.s32.totalorder %s160, %s163
      %p172 = scmp.eq.s32.totalorder %s24, 1
      %p173 = por %p171, %p172
      %p174 = scmp.ne.s32.totalorder %s163, %s164
      %p175 = scmp.eq.s32.totalorder %s24, 0
      %p176 = por %p174, %p175
      %p177 = scmp.ne.s32.totalorder %s163, %s164
      %p178 = scmp.eq.s32.totalorder %s25, 1
      %p179 = por %p177, %p178
      %p181 = scmp.ne.s32.totalorder %s164, %s180
      %p182 = scmp.eq.s32.totalorder %s25, 0
      %p183 = por %p181, %p182
      %p184 = scmp.le.s32.totalorder 1, %s19
      %p185 = scmp.lt.s32.totalorder %s19, 3
      %p186 = pnand %p184, %p185
      %p187 = pneg %p186
      // Predicated region
      $region9: #{tpu_custom_call.1} parent=5 // pred_check
        _
      $region10: #{tpu_custom_call.1} parent=5 // pred_check_branch
        %189 = sbr.rel (%p186) target = $region12
      $region11: #{tpu_custom_call.1} parent=5 // pred_region
        %s190 = ssub.s32 %s19, 1
        // Predicated region
        $region13: #{tpu_custom_call.1} parent=11 // pred_check
          %p191 = pneg %p66
        $region14: #{tpu_custom_call.1} parent=11 // pred_check_branch
          %193 = sbr.rel (%p191) target = $region16
        $region15: #{tpu_custom_call.1} parent=11 // pred_region
          %195 = vsyncadd [#allocation9], 0
          %s197 = sshll.u32 %s1, 4
          %s198 = int_to_ptr.hbm [resolvable:$true] %s197
          %s199 = sshll.u32 [#allocation8], 4
          %s200 = int_to_ptr.vmem [resolvable:$true] %s199
          %202 = dma.hbm_to_vmem [thread:$0]  %s198, 64, %s200, [#allocation9]
        $region16: #{tpu_custom_call.1} parent=11 // pred_fallthru
          _
        // Predicated region
        $region17: #{tpu_custom_call.1} parent=11 // pred_check
          %p203 = pneg %p87
        $region18: #{tpu_custom_call.1} parent=11 // pred_check_branch
          %205 = sbr.rel (%p203) target = $region20
        $region19: #{tpu_custom_call.1} parent=11 // pred_region
          _
        $region20: #{tpu_custom_call.1} parent=11 // pred_fallthru
          _
        // Predicated region
        $region21: #{tpu_custom_call.1} parent=11 // pred_check
          %p206 = pneg %p108
        $region22: #{tpu_custom_call.1} parent=11 // pred_check_branch
          %208 = sbr.rel (%p206) target = $region24
        $region23: #{tpu_custom_call.1} parent=11 // pred_region
          %210 = vsyncadd [#allocation9], 0
          %s212 = sshll.u32 %s3, 4
          %s213 = int_to_ptr.hbm [resolvable:$true] %s212
          %s214 = sshll.u32 [#allocation10], 4
          %s215 = int_to_ptr.vmem [resolvable:$true] %s214
          %217 = dma.hbm_to_vmem [thread:$0]  %s213, 64, %s215, [#allocation9]
        $region24: #{tpu_custom_call.1} parent=11 // pred_fallthru
          _
        // Predicated region
        $region25: #{tpu_custom_call.1} parent=11 // pred_check
          %p218 = pneg %p129
        $region26: #{tpu_custom_call.1} parent=11 // pred_check_branch
          %220 = sbr.rel (%p218) target = $region28
        $region27: #{tpu_custom_call.1} parent=11 // pred_region
          _
        $region28: #{tpu_custom_call.1} parent=11 // pred_fallthru
          _
        // Predicated region
        $region29: #{tpu_custom_call.1} parent=11 // pred_check
          %p221 = pneg %p150
        $region30: #{tpu_custom_call.1} parent=11 // pred_check_branch
          %223 = sbr.rel (%p221) target = $region32
        $region31: #{tpu_custom_call.1} parent=11 // pred_region
          _
        $region32: #{tpu_custom_call.1} parent=11 // pred_fallthru
          _
      $region12: #{tpu_custom_call.1} parent=5 // pred_fallthru
        _
      %p224 = scmp.lt.s32.totalorder %s19, 2
      // Predicated region
      $region33: #{tpu_custom_call.1} parent=5 // pred_check
        %p225 = pneg %p224
      $region34: #{tpu_custom_call.1} parent=5 // pred_check_branch
        %227 = sbr.rel (%p225) target = $region36
      $region35: #{tpu_custom_call.1} parent=5 // pred_region
        // Predicated region
        $region37: #{tpu_custom_call.1} parent=35 // pred_check
          %p228 = pneg %p39
        $region38: #{tpu_custom_call.1} parent=35 // pred_check_branch
          %230 = sbr.rel (%p228) target = $region40
        $region39: #{tpu_custom_call.1} parent=35 // pred_region
          %s231 = sand.u32 %s29, 1
          %s232 = scalar_lea.sflag [#allocation6], %s231
          %s233 = sand.u32 %s29, 1
          %s234 = smul.addr %s233, 8
          %s235 = scalar_lea.vmem [#allocation5], %s234
          %237 = vsyncadd %s232, 0
          %s238 = smul.addr %s19, 2
          %s239 = smul.addr %s238, 4
          %s240 = scalar_lea.hbm %s0, %s239
          %s242 = sshll.u32 %s240, 4
          %s243 = int_to_ptr.hbm [resolvable:$true] %s242
          %s244 = sshll.u32 %s235, 4
          %s245 = int_to_ptr.vmem [resolvable:$true] %s244
          %247 = dma.hbm_to_vmem [thread:$0]  %s243, 128, %s245, %s232
        $region40: #{tpu_custom_call.1} parent=35 // pred_fallthru
          _
      $region36: #{tpu_custom_call.1} parent=5 // pred_fallthru
        _
      %p248 = scmp.le.s32.totalorder 1, %s19
      %p249 = scmp.lt.s32.totalorder %s19, 3
      %p250 = pnand %p248, %p249
      %p251 = pneg %p250
      // Predicated region
      $region41: #{tpu_custom_call.1} parent=5 // pred_check
        _
      $region42: #{tpu_custom_call.1} parent=5 // pred_check_branch
        %253 = sbr.rel (%p250) target = $region44
      $region43: #{tpu_custom_call.1} parent=5 // pred_region
        %s254 = ssub.s32 %s19, 1
        %s255 = sand.u32 %s32, 1
        %s256 = scalar_lea.sflag [#allocation6], %s255
        %s257 = sand.u32 %s32, 1
        %s258 = smul.addr %s257, 8
        %s259 = scalar_lea.vmem [#allocation5], %s258
        // Predicated region
        $region45: #{tpu_custom_call.1} parent=43 // pred_check
          %p260 = pneg %p45
        $region46: #{tpu_custom_call.1} parent=43 // pred_check_branch
          %262 = sbr.rel (%p260) target = $region48
        $region47: #{tpu_custom_call.1} parent=43 // pred_region
          %264 = dma.done %s256, 128
        $region48: #{tpu_custom_call.1} parent=43 // pred_fallthru
          _
        // Predicated region
        $region49: #{tpu_custom_call.1} parent=43 // pred_check
          %p265 = pneg %p66
        $region50: #{tpu_custom_call.1} parent=43 // pred_check_branch
          %267 = sbr.rel (%p265) target = $region52
        $region51: #{tpu_custom_call.1} parent=43 // pred_region
          %269 = dma.done [#allocation9], 64
        $region52: #{tpu_custom_call.1} parent=43 // pred_fallthru
          _
        // Predicated region
        $region53: #{tpu_custom_call.1} parent=43 // pred_check
          %p270 = pneg %p108
        $region54: #{tpu_custom_call.1} parent=43 // pred_check_branch
          %272 = sbr.rel (%p270) target = $region56
        $region55: #{tpu_custom_call.1} parent=43 // pred_region
          %274 = dma.done [#allocation9], 64
        $region56: #{tpu_custom_call.1} parent=43 // pred_fallthru
          _
        %s275 = sand.u32 %s32, 1
        %s276 = scalar_lea.sflag [#allocation6], %s275
        %s277 = sand.u32 %s32, 1
        %s278 = smul.addr %s277, 8
        %s279 = scalar_lea.vmem [#allocation5], %s278
        %p280 = pneg %p45
        %p281 = pneg %p42
        %p282 = pneg %p66
        %p283 = pneg %p63
        %p284 = pneg %p87
        %p285 = pneg %p84
        %p286 = pneg %p108
        %p287 = pneg %p105
        %p288 = pneg %p129
        %p289 = pneg %p126
        %p290 = pneg %p150
        %p291 = pneg %p147
        %p292 = pneg %p176
        %p293 = pneg %p173
        %s294 = sand.u32 %s163, 1
        %s295 = scalar_lea.sflag [#allocation7], %s294
        %s296 = sand.u32 %s163, 1
        %s297 = smul.addr %s296, 8
        %s298 = scalar_lea.vmem [#allocation11], %s297
        %p299 = scmp.eq.s32.totalorder %s24, 0
        // Predicated region
        $region57: #{tpu_custom_call.1} parent=43 // pred_check
          %p300 = pneg %p299
        $region58: #{tpu_custom_call.1} parent=43 // pred_check_branch
          %302 = sbr.rel (%p300) target = $region60
        $region59: #{tpu_custom_call.1} parent=43 // pred_region
          %303 = vst [vmem:[#allocation2] sm:$0xf] 0.0
          %vm304 = vcmask 273408
          %305 = vst.msk [vmem:[#allocation2 + $0xc] sm:$0xf] %vm304, 0.0
          %306 = vst [vmem:[#allocation3] sm:$0xf] 0.0
          %vm307 = vcmask 134144
          %308 = vst.msk [vmem:[#allocation3 + $0xc] sm:$0xf] %vm307, 0.0
        $region60: #{tpu_custom_call.1} parent=43 // pred_fallthru
          _
        %v309 = vld [vmem:[%s259] sm:$0xff]
        %310 = vst [vmem:[#allocation2 + $0x4] sm:$0xff] %v309
        %v311 = vld [vmem:[%s2] sm:$0xf]
        %313 = vset.pattern.permute.xlu0 0
        %314 = vperm.xlu0 %313, %v311
        %v315 = vpop.permute.xlu0 %314
        %v317 = vld [vmem:[%s4] sm:$0xf]
        %319 = vset.pattern.permute.xlu0 0
        %320 = vperm.xlu0 %319, %v317
        %v321 = vpop.permute.xlu0 %320
        %v323 = vld [vmem:[#allocation2] sm:$0xff]
        %v324 = vld [vmem:[#allocation2 + $0x8] sm:$0xf]
        %v325 = vld [vmem:[%s5] ss:$4 sm:$0x3]
        %v327 = vperm.slane %v325, 0
        %v328 = vperm.slane %v325, 1
        %v329 = vrot.slane %v328, 4
        %vm330 = vcmask 1043456
        %v331 = vsel %vm330, %v327, %v329
        %332 = vrot.lane.b32.xlu0 %v331, 94
        %v333 = vpop.permute.xlu0 %332
        %v334 = vrot.slane %v333, 4
        %vm335 = vcmask 769024
        %v336 = vsel %vm335, %v334, %v333
        %v339 = vmul.f32 %v323, %v336
        %v340 = vmul.f32 %v324, %v334
        %343 = vst [vmem:[#allocation1] ss:$2 sm:$0xff] %v339
        %s344 = scalar_lea.vmem [#allocation1], 16
        %345 = vst [vmem:[%s344] ss:$2 sm:$0xff] %v340
        %v346 = vld.sshfl [vmem:[#allocation1] sm:$0xff pattern:$0x75316420]
        %v347 = vld.sshfl [vmem:[#allocation1 + $0x8] sm:$0xff pattern:$0x75316420]
        %v348 = vld.sshfl [vmem:[#allocation1 + $0x10] sm:$0xff pattern:$0x75316420]
        %349 = vrot.lane.b32.xlu0 %v346, 34
        %v350 = vpop.permute.xlu0 %349
        %351 = vrot.lane.b32.xlu0 %v347, 34
        %v352 = vpop.permute.xlu0 %351
        %353 = vrot.lane.b32.xlu0 %v348, 34
        %v354 = vpop.permute.xlu0 %353
        %vm355 = vcmask 277504
        %v356 = vsel %vm355, %v350, %v352
        %v357 = vsel %vm355, %v352, %v354
        %360 = vst [vmem:[#allocation4] sm:$0xf] %v356
        %361 = vst [vmem:[#allocation4 + $0x8] sm:$0xf] %v357
        %v362 = vld [vmem:[#allocation2] sm:$0xff]
        %v363 = vld [vmem:[#allocation2 + $0x8] sm:$0xf]
        %s366 = scalar_lea.vmem [#allocation1], 1
        %367 = vst [vmem:[%s366] ss:$2 sm:$0xff] %v362
        %s368 = scalar_lea.vmem [#allocation1], 17
        %369 = vst [vmem:[%s368] ss:$2 sm:$0xff] %v363
        %v370 = vld.sshfl [vmem:[#allocation1] sm:$0xff pattern:$0x75316420]
        %v371 = vld.sshfl [vmem:[#allocation1 + $0x8] sm:$0xff pattern:$0x75316420]
        %v372 = vld.sshfl [vmem:[#allocation1 + $0x10] sm:$0xff pattern:$0x75316420]
        %373 = vrot.lane.b32.xlu0 %v370, 32
        %v374 = vpop.permute.xlu0 %373
        %375 = vrot.lane.b32.xlu0 %v371, 32
        %v376 = vpop.permute.xlu0 %375
        %377 = vrot.lane.b32.xlu0 %v372, 32
        %v378 = vpop.permute.xlu0 %377
        %vm379 = vcmask 261120
        %v380 = vsel %vm379, %v374, %v376
        %v381 = vsel %vm379, %v376, %v378
        %384 = vst [vmem:[#allocation4] sm:$0xf0] %v380
        %385 = vst [vmem:[#allocation4 + $0x8] sm:$0xf0] %v381
        %v386 = vld [vmem:[#allocation2] sm:$0xff]
        %v387 = vld [vmem:[#allocation2 + $0x8] sm:$0xf]
        %s388 = scalar_lea.vmem %s5, 3
        %v389 = vld [vmem:[%s388] ss:$4 sm:$0x3]
        %v391 = vperm.slane %v389, 0
        %v392 = vperm.slane %v389, 1
        %v393 = vrot.slane %v392, 4
        %v394 = vsel %vm330, %v391, %v393
        %395 = vrot.lane.b32.xlu0 %v394, 98
        %v396 = vpop.permute.xlu0 %395
        %v397 = vrot.slane %v396, 4
        %vm398 = vcmask 801792
        %v399 = vsel %vm398, %v397, %v396
        %v402 = vmul.f32 %v386, %v399
        %v403 = vmul.f32 %v387, %v397
        %406 = vst [vmem:[#allocation1] ss:$2 sm:$0xff] %v402
        %s407 = scalar_lea.vmem [#allocation1], 16
        %408 = vst [vmem:[%s407] ss:$2 sm:$0xff] %v403
        %v409 = vld.sshfl [vmem:[#allocation1] sm:$0xff pattern:$0x75316420]
        %v410 = vld.sshfl [vmem:[#allocation1 + $0x8] sm:$0xff pattern:$0x75316420]
        %v411 = vld.sshfl [vmem:[#allocation1 + $0x10] sm:$0xff pattern:$0x75316420]
        %412 = vrot.lane.b32.xlu0 %v409, 30
        %v413 = vpop.permute.xlu0 %412
        %414 = vrot.lane.b32.xlu0 %v410, 30
        %v415 = vpop.permute.xlu0 %414
        %416 = vrot.lane.b32.xlu0 %v411, 30
        %v417 = vpop.permute.xlu0 %416
        %vm418 = vcmask 244736
        %v419 = vsel %vm418, %v413, %v415
        %v420 = vsel %vm418, %v415, %v417
        %423 = vst [vmem:[#allocation4 + $0x10] sm:$0xf] %v419
        %424 = vst [vmem:[#allocation4 + $0x18] sm:$0xf] %v420
        %v425 = vld [vmem:[#allocation2] sm:$0xff]
        %v426 = vld [vmem:[#allocation2 + $0x8] sm:$0xf]
        %v427 = vld [vmem:[%s5] ss:$4 sm:$0x3]
        %v429 = vperm.slane %v427, 0
        %v430 = vperm.slane %v427, 1
        %v431 = vrot.slane %v430, 4
        %v432 = vsel %vm330, %v429, %v431
        %433 = vrot.lane.b32.xlu0 %v432, 126
        %v434 = vpop.permute.xlu0 %433
        %v435 = vrot.slane %v434, 4
        %vm436 = vcmask 1031168
        %v437 = vsel %vm436, %v435, %v434
        %v440 = vmul.f32 %v425, %v437
        %v441 = vmul.f32 %v426, %v435
        %s444 = scalar_lea.vmem [#allocation1], 1
        %445 = vst [vmem:[%s444] ss:$2 sm:$0xff] %v440
        %s446 = scalar_lea.vmem [#allocation1], 17
        %447 = vst [vmem:[%s446] ss:$2 sm:$0xff] %v441
        %v448 = vld.sshfl [vmem:[#allocation1] sm:$0xff pattern:$0x75316420]
        %v449 = vld.sshfl [vmem:[#allocation1 + $0x8] sm:$0xff pattern:$0x75316420]
        %v450 = vld.sshfl [vmem:[#allocation1 + $0x10] sm:$0xff pattern:$0x75316420]
        %451 = vrot.lane.b32.xlu0 %v448, 2
        %v452 = vpop.permute.xlu0 %451
        %453 = vrot.lane.b32.xlu0 %v449, 2
        %v454 = vpop.permute.xlu0 %453
        %455 = vrot.lane.b32.xlu0 %v450, 2
        %v456 = vpop.permute.xlu0 %455
        %vm457 = vcmask 15360
        %v458 = vsel %vm457, %v452, %v454
        %v459 = vsel %vm457, %v454, %v456
        %462 = vst [vmem:[#allocation4 + $0x10] sm:$0xf0] %v458
        %463 = vst [vmem:[#allocation4 + $0x18] sm:$0xf0] %v459
        %v464 = vld [vmem:[#allocation2 + $0x4] sm:$0xff]
        %466 = vst [vmem:[#allocation1] ss:$2 sm:$0xff] %v464
        %v467 = vld.sshfl [vmem:[#allocation1] sm:$0xff pattern:$0x75316420]
        %v468 = vld.sshfl [vmem:[#allocation1 + $0x8] sm:$0xff pattern:$0x75316420]
        %471 = vst [vmem:[#allocation4 + $0x20] sm:$0xf] %v467
        %472 = vst [vmem:[#allocation4 + $0x28] sm:$0xf] %v468
        %v473 = vld [vmem:[#allocation2 + $0x4] sm:$0xff]
        %v474 = vld [vmem:[#allocation2 + $0xc] sm:$0xf]
        %v475 = vld [vmem:[%s388] ss:$4 sm:$0x3]
        %v477 = vperm.slane %v475, 0
        %v478 = vperm.slane %v475, 1
        %v479 = vrot.slane %v478, 4
        %v480 = vsel %vm330, %v477, %v479
        %481 = vrot.lane.b32.xlu0 %v480, 2
        %v482 = vpop.permute.xlu0 %481
        %v483 = vrot.slane %v482, 4
        %v484 = vsel %vm457, %v483, %v482
        %v487 = vmul.f32 %v473, %v484
        %v488 = vmul.f32 %v474, %v483
        %s491 = scalar_lea.vmem [#allocation1], 1
        %492 = vst [vmem:[%s491] ss:$2 sm:$0xff] %v487
        %s493 = scalar_lea.vmem [#allocation1], 17
        %494 = vst [vmem:[%s493] ss:$2 sm:$0xff] %v488
        %v495 = vld.sshfl [vmem:[#allocation1] sm:$0xff pattern:$0x75316420]
        %v496 = vld.sshfl [vmem:[#allocation1 + $0x8] sm:$0xff pattern:$0x75316420]
        %v497 = vld.sshfl [vmem:[#allocation1 + $0x10] sm:$0xff pattern:$0x75316420]
        %498 = vrot.lane.b32.xlu0 %v495, 126
        %v499 = vpop.permute.xlu0 %498
        %500 = vrot.lane.b32.xlu0 %v496, 126
        %v501 = vpop.permute.xlu0 %500
        %502 = vrot.lane.b32.xlu0 %v497, 126
        %v503 = vpop.permute.xlu0 %502
        %v504 = vsel %vm436, %v499, %v501
        %v505 = vsel %vm436, %v501, %v503
        %508 = vst [vmem:[#allocation4 + $0x20] sm:$0xf0] %v504
        %509 = vst [vmem:[#allocation4 + $0x28] sm:$0xf0] %v505
        %v510 = vld [vmem:[#allocation2 + $0x4] sm:$0xff]
        %v511 = vld [vmem:[#allocation2 + $0xc] sm:$0xf]
        %v512 = vld [vmem:[%s5] ss:$4 sm:$0x3]
        %v514 = vperm.slane %v512, 0
        %v515 = vperm.slane %v512, 1
        %v516 = vrot.slane %v515, 4
        %v517 = vsel %vm330, %v514, %v516
        %518 = vrot.lane.b32.xlu0 %v517, 30
        %v519 = vpop.permute.xlu0 %518
        %v520 = vrot.slane %v519, 4
        %v521 = vsel %vm418, %v520, %v519
        %v524 = vmul.f32 %v510, %v521
        %v525 = vmul.f32 %v511, %v520
        %528 = vst [vmem:[#allocation1] ss:$2 sm:$0xff] %v524
        %s529 = scalar_lea.vmem [#allocation1], 16
        %530 = vst [vmem:[%s529] ss:$2 sm:$0xff] %v525
        %v531 = vld.sshfl [vmem:[#allocation1] sm:$0xff pattern:$0x75316420]
        %v532 = vld.sshfl [vmem:[#allocation1 + $0x8] sm:$0xff pattern:$0x75316420]
        %v533 = vld.sshfl [vmem:[#allocation1 + $0x10] sm:$0xff pattern:$0x75316420]
        %534 = vrot.lane.b32.xlu0 %v531, 98
        %v535 = vpop.permute.xlu0 %534
        %536 = vrot.lane.b32.xlu0 %v532, 98
        %v537 = vpop.permute.xlu0 %536
        %538 = vrot.lane.b32.xlu0 %v533, 98
        %v539 = vpop.permute.xlu0 %538
        %v540 = vsel %vm398, %v535, %v537
        %v541 = vsel %vm398, %v537, %v539
        %544 = vst [vmem:[#allocation4 + $0x30] sm:$0xf] %v540
        %545 = vst [vmem:[#allocation4 + $0x38] sm:$0xf] %v541
        %v546 = vld [vmem:[#allocation2 + $0x4] sm:$0xff]
        %v547 = vld [vmem:[#allocation2 + $0xc] sm:$0xf]
        %s550 = scalar_lea.vmem [#allocation1], 1
        %551 = vst [vmem:[%s550] ss:$2 sm:$0xff] %v546
        %s552 = scalar_lea.vmem [#allocation1], 17
        %553 = vst [vmem:[%s552] ss:$2 sm:$0xff] %v547
        %v554 = vld.sshfl [vmem:[#allocation1] sm:$0xff pattern:$0x75316420]
        %v555 = vld.sshfl [vmem:[#allocation1 + $0x8] sm:$0xff pattern:$0x75316420]
        %v556 = vld.sshfl [vmem:[#allocation1 + $0x10] sm:$0xff pattern:$0x75316420]
        %557 = vrot.lane.b32.xlu0 %v554, 96
        %v558 = vpop.permute.xlu0 %557
        %559 = vrot.lane.b32.xlu0 %v555, 96
        %v560 = vpop.permute.xlu0 %559
        %561 = vrot.lane.b32.xlu0 %v556, 96
        %v562 = vpop.permute.xlu0 %561
        %vm563 = vcmask 785408
        %v564 = vsel %vm563, %v558, %v560
        %v565 = vsel %vm563, %v560, %v562
        %568 = vst [vmem:[#allocation4 + $0x30] sm:$0xf0] %v564
        %569 = vst [vmem:[#allocation4 + $0x38] sm:$0xf0] %v565
        %v570 = vld [vmem:[#allocation2 + $0x4] sm:$0xff]
        %v571 = vld [vmem:[#allocation2 + $0xc] sm:$0xf]
        %v572 = vld [vmem:[%s388] ss:$4 sm:$0x3]
        %v574 = vperm.slane %v572, 0
        %v575 = vperm.slane %v572, 1
        %v576 = vrot.slane %v575, 4
        %v577 = vsel %vm330, %v574, %v576
        %578 = vrot.lane.b32.xlu0 %v577, 34
        %v579 = vpop.permute.xlu0 %578
        %v580 = vrot.slane %v579, 4
        %v581 = vsel %vm355, %v580, %v579
        %v584 = vmul.f32 %v570, %v581
        %v585 = vmul.f32 %v571, %v580
        %588 = vst [vmem:[#allocation1] ss:$2 sm:$0xff] %v584
        %s589 = scalar_lea.vmem [#allocation1], 16
        %590 = vst [vmem:[%s589] ss:$2 sm:$0xff] %v585
        %v591 = vld.sshfl [vmem:[#allocation1] sm:$0xff pattern:$0x75316420]
        %v592 = vld.sshfl [vmem:[#allocation1 + $0x8] sm:$0xff pattern:$0x75316420]
        %v593 = vld.sshfl [vmem:[#allocation1 + $0x10] sm:$0xff pattern:$0x75316420]
        %594 = vrot.lane.b32.xlu0 %v591, 94
        %v595 = vpop.permute.xlu0 %594
        %596 = vrot.lane.b32.xlu0 %v592, 94
        %v597 = vpop.permute.xlu0 %596
        %598 = vrot.lane.b32.xlu0 %v593, 94
        %v599 = vpop.permute.xlu0 %598
        %v600 = vsel %vm335, %v595, %v597
        %v601 = vsel %vm335, %v597, %v599
        %604 = vst [vmem:[#allocation4 + $0x40] sm:$0xf] %v600
        %605 = vst [vmem:[#allocation4 + $0x48] sm:$0xf] %v601
        %v606 = vld [vmem:[#allocation8] sm:$0xf]
        %v607 = vld [vmem:[#allocation4] sm:$0xff]
        %v608 = vld [vmem:[#allocation4 + $0x8] sm:$0xff]
        %v609 = vld [vmem:[#allocation4 + $0x10] sm:$0xff]
        %v610 = vld [vmem:[#allocation4 + $0x18] sm:$0xff]
        %v611 = vld [vmem:[#allocation4 + $0x20] sm:$0xff]
        %v612 = vld [vmem:[#allocation4 + $0x28] sm:$0xff]
        %v613 = vld [vmem:[#allocation4 + $0x30] sm:$0xff]
        %v614 = vld [vmem:[#allocation4 + $0x38] sm:$0xff]
        %v615 = vld [vmem:[#allocation4 + $0x40] sm:$0xf]
        %v616 = vld [vmem:[#allocation4 + $0x48] sm:$0xf]
        %vm617 = vcmask 293888
        %v619 = vsel %vm617, %v606, 0
        %v622 = vsel %vm330, %v615, 0
        %v625 = vsel %vm330, %v616, 0
        %627 = vmatpush.msra.mxu0 0.0
        %628 = vmatpush.msra.mxu0 0.0
        %629 = vmatpush.msra.mxu0 0.0
        %630 = vmatpush.msra.mxu0 0.0
        %631 = vmatpush.msra.mxu0 0.0
        %632 = vmatpush.msra.mxu0 0.0
        %633 = vmatpush.msra.mxu0 0.0
        %634 = vmatpush.msra.mxu0 0.0
        %635 = vmatpush.msra.mxu0 0.0
        %636 = vmatpush.msra.mxu0 0.0
        %637 = vmatpush.msra.mxu0 0.0
        %638 = vmatpush.msra.mxu0 %v622
        %639 = vmatpush.msra.mxu0 %v613
        %640 = vmatpush.msra.mxu0 %v611
        %641 = vmatpush.msra.mxu0 %v609
        %642 = vmatpush.msra.mxu0 %v607
        %643 = vmatmul.f32.gmra.mxu0 %v619
        %v644 = vpop.f32.mrf.mxu0
        %v645 = vadd.f32 %v315, %v644
        %646 = vdwg.mxu0
        %647 = vmatpush.msra.mxu0 0.0
        %648 = vmatpush.msra.mxu0 0.0
        %649 = vmatpush.msra.mxu0 0.0
        %650 = vmatpush.msra.mxu0 0.0
        %651 = vmatpush.msra.mxu0 0.0
        %652 = vmatpush.msra.mxu0 0.0
        %653 = vmatpush.msra.mxu0 0.0
        %654 = vmatpush.msra.mxu0 0.0
        %655 = vmatpush.msra.mxu0 0.0
        %656 = vmatpush.msra.mxu0 0.0
        %657 = vmatpush.msra.mxu0 0.0
        %658 = vmatpush.msra.mxu0 %v625
        %659 = vmatpush.msra.mxu0 %v614
        %660 = vmatpush.msra.mxu0 %v612
        %661 = vmatpush.msra.mxu0 %v610
        %662 = vmatpush.msra.mxu0 %v608
        %663 = vmatmul.f32.gmra.mxu0 %v619
        %v664 = vpop.f32.mrf.mxu0
        %v665 = vadd.f32 %v315, %v664
        %666 = vdwg.mxu0
        %v667 = vmax.f32 %v645, 0.0
        %v668 = vmax.f32 %v665, 0.0
        %v671 = vrot.slane %v668, 4
        %v672 = vsel %vm330, %v667, %v671
        %674 = vst [vmem:[#allocation3 + $0x4] sm:$0xff] %v672
        %v675 = vld [vmem:[#allocation3] sm:$0xff]
        %v676 = vld [vmem:[#allocation3 + $0x8] sm:$0xf]
        %s677 = scalar_lea.vmem %s5, 1
        %v678 = vld [vmem:[%s677] ss:$4 sm:$0x3]
        %v680 = vperm.slane %v678, 0
        %v681 = vperm.slane %v678, 1
        %v682 = vrot.slane %v681, 4
        %v683 = vsel %vm330, %v680, %v682
        %684 = vrot.lane.b32.xlu0 %v683, 111
        %v685 = vpop.permute.xlu0 %684
        %v686 = vrot.slane %v685, 4
        %vm687 = vcmask 908288
        %v688 = vsel %vm687, %v686, %v685
        %v691 = vmul.f32 %v675, %v688
        %v692 = vmul.f32 %v676, %v686
        %695 = vst [vmem:[#allocation1] ss:$2 sm:$0xff] %v691
        %s696 = scalar_lea.vmem [#allocation1], 16
        %697 = vst [vmem:[%s696] ss:$2 sm:$0xff] %v692
        %v698 = vld.sshfl [vmem:[#allocation1] sm:$0xff pattern:$0x75316420]
        %v699 = vld.sshfl [vmem:[#allocation1 + $0x8] sm:$0xff pattern:$0x75316420]
        %v700 = vld.sshfl [vmem:[#allocation1 + $0x10] sm:$0xff pattern:$0x75316420]
        %701 = vrot.lane.b32.xlu0 %v698, 17
        %v702 = vpop.permute.xlu0 %701
        %703 = vrot.lane.b32.xlu0 %v699, 17
        %v704 = vpop.permute.xlu0 %703
        %705 = vrot.lane.b32.xlu0 %v700, 17
        %v706 = vpop.permute.xlu0 %705
        %vm707 = vcmask 138240
        %v708 = vsel %vm707, %v702, %v704
        %v709 = vsel %vm707, %v704, %v706
        %712 = vst [vmem:[#allocation4] sm:$0xf] %v708
        %713 = vst [vmem:[#allocation4 + $0x8] sm:$0xf] %v709
        %v714 = vld [vmem:[#allocation3] sm:$0xff]
        %v715 = vld [vmem:[#allocation3 + $0x8] sm:$0xf]
        %s718 = scalar_lea.vmem [#allocation1], 1
        %719 = vst [vmem:[%s718] ss:$2 sm:$0xff] %v714
        %s720 = scalar_lea.vmem [#allocation1], 17
        %721 = vst [vmem:[%s720] ss:$2 sm:$0xff] %v715
        %v722 = vld.sshfl [vmem:[#allocation1] sm:$0xff pattern:$0x75316420]
        %v723 = vld.sshfl [vmem:[#allocation1 + $0x8] sm:$0xff pattern:$0x75316420]
        %v724 = vld.sshfl [vmem:[#allocation1 + $0x10] sm:$0xff pattern:$0x75316420]
        %725 = vrot.lane.b32.xlu0 %v722, 16
        %v726 = vpop.permute.xlu0 %725
        %727 = vrot.lane.b32.xlu0 %v723, 16
        %v728 = vpop.permute.xlu0 %727
        %729 = vrot.lane.b32.xlu0 %v724, 16
        %v730 = vpop.permute.xlu0 %729
        %vm731 = vcmask 130048
        %v732 = vsel %vm731, %v726, %v728
        %v733 = vsel %vm731, %v728, %v730
        %736 = vst [vmem:[#allocation4] sm:$0xf0] %v732
        %737 = vst [vmem:[#allocation4 + $0x8] sm:$0xf0] %v733
        %v738 = vld [vmem:[#allocation3] sm:$0xff]
        %v739 = vld [vmem:[#allocation3 + $0x8] sm:$0xf]
        %s740 = scalar_lea.vmem %s5, 2
        %v741 = vld [vmem:[%s740] ss:$4 sm:$0x3]
        %v743 = vperm.slane %v741, 0
        %v744 = vperm.slane %v741, 1
        %v745 = vrot.slane %v744, 4
        %v746 = vsel %vm330, %v743, %v745
        %747 = vrot.lane.b32.xlu0 %v746, 113
        %v748 = vpop.permute.xlu0 %747
        %v749 = vrot.slane %v748, 4
        %vm750 = vcmask 924672
        %v751 = vsel %vm750, %v749, %v748
        %v754 = vmul.f32 %v738, %v751
        %v755 = vmul.f32 %v739, %v749
        %758 = vst [vmem:[#allocation1] ss:$2 sm:$0xff] %v754
        %s759 = scalar_lea.vmem [#allocation1], 16
        %760 = vst [vmem:[%s759] ss:$2 sm:$0xff] %v755
        %v761 = vld.sshfl [vmem:[#allocation1] sm:$0xff pattern:$0x75316420]
        %v762 = vld.sshfl [vmem:[#allocation1 + $0x8] sm:$0xff pattern:$0x75316420]
        %v763 = vld.sshfl [vmem:[#allocation1 + $0x10] sm:$0xff pattern:$0x75316420]
        %764 = vrot.lane.b32.xlu0 %v761, 15
        %v765 = vpop.permute.xlu0 %764
        %766 = vrot.lane.b32.xlu0 %v762, 15
        %v767 = vpop.permute.xlu0 %766
        %768 = vrot.lane.b32.xlu0 %v763, 15
        %v769 = vpop.permute.xlu0 %768
        %vm770 = vcmask 121856
        %v771 = vsel %vm770, %v765, %v767
        %v772 = vsel %vm770, %v767, %v769
        %775 = vst [vmem:[#allocation4 + $0x10] sm:$0xf] %v771
        %776 = vst [vmem:[#allocation4 + $0x18] sm:$0xf] %v772
        %v777 = vld [vmem:[#allocation3] sm:$0xff]
        %v778 = vld [vmem:[#allocation3 + $0x8] sm:$0xf]
        %v779 = vld [vmem:[%s677] ss:$4 sm:$0x3]
        %v781 = vperm.slane %v779, 0
        %v782 = vperm.slane %v779, 1
        %v783 = vrot.slane %v782, 4
        %v784 = vsel %vm330, %v781, %v783
        %785 = vrot.lane.b32.xlu0 %v784, 127
        %v786 = vpop.permute.xlu0 %785
        %v787 = vrot.slane %v786, 4
        %vm788 = vcmask 1039360
        %v789 = vsel %vm788, %v787, %v786
        %v792 = vmul.f32 %v777, %v789
        %v793 = vmul.f32 %v778, %v787
        %s796 = scalar_lea.vmem [#allocation1], 1
        %797 = vst [vmem:[%s796] ss:$2 sm:$0xff] %v792
        %s798 = scalar_lea.vmem [#allocation1], 17
        %799 = vst [vmem:[%s798] ss:$2 sm:$0xff] %v793
        %v800 = vld.sshfl [vmem:[#allocation1] sm:$0xff pattern:$0x75316420]
        %v801 = vld.sshfl [vmem:[#allocation1 + $0x8] sm:$0xff pattern:$0x75316420]
        %v802 = vld.sshfl [vmem:[#allocation1 + $0x10] sm:$0xff pattern:$0x75316420]
        %803 = vrot.lane.b32.xlu0 %v800, 1
        %v804 = vpop.permute.xlu0 %803
        %805 = vrot.lane.b32.xlu0 %v801, 1
        %v806 = vpop.permute.xlu0 %805
        %807 = vrot.lane.b32.xlu0 %v802, 1
        %v808 = vpop.permute.xlu0 %807
        %vm809 = vcmask 7168
        %v810 = vsel %vm809, %v804, %v806
        %v811 = vsel %vm809, %v806, %v808
        %814 = vst [vmem:[#allocation4 + $0x10] sm:$0xf0] %v810
        %815 = vst [vmem:[#allocation4 + $0x18] sm:$0xf0] %v811
        %v816 = vld [vmem:[#allocation3 + $0x4] sm:$0xff]
        %818 = vst [vmem:[#allocation1] ss:$2 sm:$0xff] %v816
        %v819 = vld.sshfl [vmem:[#allocation1] sm:$0xff pattern:$0x75316420]
        %v820 = vld.sshfl [vmem:[#allocation1 + $0x8] sm:$0xff pattern:$0x75316420]
        %823 = vst [vmem:[#allocation4 + $0x20] sm:$0xf] %v819
        %824 = vst [vmem:[#allocation4 + $0x28] sm:$0xf] %v820
        %v825 = vld [vmem:[#allocation3 + $0x4] sm:$0xff]
        %v826 = vld [vmem:[#allocation3 + $0xc] sm:$0xf]
        %v827 = vld [vmem:[%s740] ss:$4 sm:$0x3]
        %v829 = vperm.slane %v827, 0
        %v830 = vperm.slane %v827, 1
        %v831 = vrot.slane %v830, 4
        %v832 = vsel %vm330, %v829, %v831
        %833 = vrot.lane.b32.xlu0 %v832, 1
        %v834 = vpop.permute.xlu0 %833
        %v835 = vrot.slane %v834, 4
        %v836 = vsel %vm809, %v835, %v834
        %v839 = vmul.f32 %v825, %v836
        %v840 = vmul.f32 %v826, %v835
        %s843 = scalar_lea.vmem [#allocation1], 1
        %844 = vst [vmem:[%s843] ss:$2 sm:$0xff] %v839
        %s845 = scalar_lea.vmem [#allocation1], 17
        %846 = vst [vmem:[%s845] ss:$2 sm:$0xff] %v840
        %v847 = vld.sshfl [vmem:[#allocation1] sm:$0xff pattern:$0x75316420]
        %v848 = vld.sshfl [vmem:[#allocation1 + $0x8] sm:$0xff pattern:$0x75316420]
        %v849 = vld.sshfl [vmem:[#allocation1 + $0x10] sm:$0xff pattern:$0x75316420]
        %850 = vrot.lane.b32.xlu0 %v847, 127
        %v851 = vpop.permute.xlu0 %850
        %852 = vrot.lane.b32.xlu0 %v848, 127
        %v853 = vpop.permute.xlu0 %852
        %854 = vrot.lane.b32.xlu0 %v849, 127
        %v855 = vpop.permute.xlu0 %854
        %v856 = vsel %vm788, %v851, %v853
        %v857 = vsel %vm788, %v853, %v855
        %860 = vst [vmem:[#allocation4 + $0x20] sm:$0xf0] %v856
        %861 = vst [vmem:[#allocation4 + $0x28] sm:$0xf0] %v857
        %v862 = vld [vmem:[#allocation3 + $0x4] sm:$0xff]
        %v863 = vld [vmem:[#allocation3 + $0xc] sm:$0xf]
        %v864 = vld [vmem:[%s677] ss:$4 sm:$0x3]
        %v866 = vperm.slane %v864, 0
        %v867 = vperm.slane %v864, 1
        %v868 = vrot.slane %v867, 4
        %v869 = vsel %vm330, %v866, %v868
        %870 = vrot.lane.b32.xlu0 %v869, 15
        %v871 = vpop.permute.xlu0 %870
        %v872 = vrot.slane %v871, 4
        %v873 = vsel %vm770, %v872, %v871
        %v876 = vmul.f32 %v862, %v873
        %v877 = vmul.f32 %v863, %v872
        %880 = vst [vmem:[#allocation1] ss:$2 sm:$0xff] %v876
        %s881 = scalar_lea.vmem [#allocation1], 16
        %882 = vst [vmem:[%s881] ss:$2 sm:$0xff] %v877
        %v883 = vld.sshfl [vmem:[#allocation1] sm:$0xff pattern:$0x75316420]
        %v884 = vld.sshfl [vmem:[#allocation1 + $0x8] sm:$0xff pattern:$0x75316420]
        %v885 = vld.sshfl [vmem:[#allocation1 + $0x10] sm:$0xff pattern:$0x75316420]
        %886 = vrot.lane.b32.xlu0 %v883, 113
        %v887 = vpop.permute.xlu0 %886
        %888 = vrot.lane.b32.xlu0 %v884, 113
        %v889 = vpop.permute.xlu0 %888
        %890 = vrot.lane.b32.xlu0 %v885, 113
        %v891 = vpop.permute.xlu0 %890
        %v892 = vsel %vm750, %v887, %v889
        %v893 = vsel %vm750, %v889, %v891
        %896 = vst [vmem:[#allocation4 + $0x30] sm:$0xf] %v892
        %897 = vst [vmem:[#allocation4 + $0x38] sm:$0xf] %v893
        %v898 = vld [vmem:[#allocation3 + $0x4] sm:$0xff]
        %v899 = vld [vmem:[#allocation3 + $0xc] sm:$0xf]
        %s902 = scalar_lea.vmem [#allocation1], 1
        %903 = vst [vmem:[%s902] ss:$2 sm:$0xff] %v898
        %s904 = scalar_lea.vmem [#allocation1], 17
        %905 = vst [vmem:[%s904] ss:$2 sm:$0xff] %v899
        %v906 = vld.sshfl [vmem:[#allocation1] sm:$0xff pattern:$0x75316420]
        %v907 = vld.sshfl [vmem:[#allocation1 + $0x8] sm:$0xff pattern:$0x75316420]
        %v908 = vld.sshfl [vmem:[#allocation1 + $0x10] sm:$0xff pattern:$0x75316420]
        %909 = vrot.lane.b32.xlu0 %v906, 112
        %v910 = vpop.permute.xlu0 %909
        %911 = vrot.lane.b32.xlu0 %v907, 112
        %v912 = vpop.permute.xlu0 %911
        %913 = vrot.lane.b32.xlu0 %v908, 112
        %v914 = vpop.permute.xlu0 %913
        %vm915 = vcmask 916480
        %v916 = vsel %vm915, %v910, %v912
        %v917 = vsel %vm915, %v912, %v914
        %920 = vst [vmem:[#allocation4 + $0x30] sm:$0xf0] %v916
        %921 = vst [vmem:[#allocation4 + $0x38] sm:$0xf0] %v917
        %v922 = vld [vmem:[#allocation3 + $0x4] sm:$0xff]
        %v923 = vld [vmem:[#allocation3 + $0xc] sm:$0xf]
        %v924 = vld [vmem:[%s740] ss:$4 sm:$0x3]
        %v926 = vperm.slane %v924, 0
        %v927 = vperm.slane %v924, 1
        %v928 = vrot.slane %v927, 4
        %v929 = vsel %vm330, %v926, %v928
        %930 = vrot.lane.b32.xlu0 %v929, 17
        %v931 = vpop.permute.xlu0 %930
        %v932 = vrot.slane %v931, 4
        %v933 = vsel %vm707, %v932, %v931
        %v936 = vmul.f32 %v922, %v933
        %v937 = vmul.f32 %v923, %v932
        %940 = vst [vmem:[#allocation1] ss:$2 sm:$0xff] %v936
        %s941 = scalar_lea.vmem [#allocation1], 16
        %942 = vst [vmem:[%s941] ss:$2 sm:$0xff] %v937
        %v943 = vld.sshfl [vmem:[#allocation1] sm:$0xff pattern:$0x75316420]
        %v944 = vld.sshfl [vmem:[#allocation1 + $0x8] sm:$0xff pattern:$0x75316420]
        %v945 = vld.sshfl [vmem:[#allocation1 + $0x10] sm:$0xff pattern:$0x75316420]
        %946 = vrot.lane.b32.xlu0 %v943, 111
        %v947 = vpop.permute.xlu0 %946
        %948 = vrot.lane.b32.xlu0 %v944, 111
        %v949 = vpop.permute.xlu0 %948
        %950 = vrot.lane.b32.xlu0 %v945, 111
        %v951 = vpop.permute.xlu0 %950
        %v952 = vsel %vm687, %v947, %v949
        %v953 = vsel %vm687, %v949, %v951
        %956 = vst [vmem:[#allocation4 + $0x40] sm:$0xf] %v952
        %957 = vst [vmem:[#allocation4 + $0x48] sm:$0xf] %v953
        %v958 = vld [vmem:[#allocation10] sm:$0xf]
        %v959 = vld [vmem:[#allocation4] sm:$0xff]
        %v960 = vld [vmem:[#allocation4 + $0x8] sm:$0xff]
        %v961 = vld [vmem:[#allocation4 + $0x10] sm:$0xff]
        %v962 = vld [vmem:[#allocation4 + $0x18] sm:$0xff]
        %v963 = vld [vmem:[#allocation4 + $0x20] sm:$0xff]
        %v964 = vld [vmem:[#allocation4 + $0x28] sm:$0xff]
        %v965 = vld [vmem:[#allocation4 + $0x30] sm:$0xff]
        %v966 = vld [vmem:[#allocation4 + $0x38] sm:$0xff]
        %v967 = vld [vmem:[#allocation4 + $0x40] sm:$0xf]
        %v968 = vld [vmem:[#allocation4 + $0x48] sm:$0xf]
        %v970 = vsel %vm617, %v958, 0
        %v973 = vsel %vm330, %v967, 0
        %v976 = vsel %vm330, %v968, 0
        %978 = vmatpush.msra.mxu0 0.0
        %979 = vmatpush.msra.mxu0 0.0
        %980 = vmatpush.msra.mxu0 0.0
        %981 = vmatpush.msra.mxu0 0.0
        %982 = vmatpush.msra.mxu0 0.0
        %983 = vmatpush.msra.mxu0 0.0
        %984 = vmatpush.msra.mxu0 0.0
        %985 = vmatpush.msra.mxu0 0.0
        %986 = vmatpush.msra.mxu0 0.0
        %987 = vmatpush.msra.mxu0 0.0
        %988 = vmatpush.msra.mxu0 0.0
        %989 = vmatpush.msra.mxu0 %v973
        %990 = vmatpush.msra.mxu0 %v965
        %991 = vmatpush.msra.mxu0 %v963
        %992 = vmatpush.msra.mxu0 %v961
        %993 = vmatpush.msra.mxu0 %v959
        %994 = vmatmul.f32.gmra.mxu0 %v970
        %v995 = vpop.f32.mrf.mxu0
        %v996 = vadd.f32 %v321, %v995
        %997 = vdwg.mxu0
        %998 = vmatpush.msra.mxu0 0.0
        %999 = vmatpush.msra.mxu0 0.0
        %1000 = vmatpush.msra.mxu0 0.0
        %1001 = vmatpush.msra.mxu0 0.0
        %1002 = vmatpush.msra.mxu0 0.0
        %1003 = vmatpush.msra.mxu0 0.0
        %1004 = vmatpush.msra.mxu0 0.0
        %1005 = vmatpush.msra.mxu0 0.0
        %1006 = vmatpush.msra.mxu0 0.0
        %1007 = vmatpush.msra.mxu0 0.0
        %1008 = vmatpush.msra.mxu0 0.0
        %1009 = vmatpush.msra.mxu0 %v976
        %1010 = vmatpush.msra.mxu0 %v966
        %1011 = vmatpush.msra.mxu0 %v964
        %1012 = vmatpush.msra.mxu0 %v962
        %1013 = vmatpush.msra.mxu0 %v960
        %1014 = vmatmul.f32.gmra.mxu0 %v970
        %v1015 = vpop.f32.mrf.mxu0
        %v1016 = vadd.f32 %v321, %v1015
        %1017 = vdwg.mxu0
        %v1018 = vmax.f32 %v996, 0.0
        %v1019 = vmax.f32 %v1016, 0.0
        %v1022 = vrot.slane %v1019, 4
        %v1023 = vsel %vm330, %v1018, %v1022
        %1025 = vst [vmem:[%s298] sm:$0xff] %v1023
        %s1026 = sand.u32 %s163, 1
        %s1027 = scalar_lea.sflag [#allocation7], %s1026
        %s1028 = sand.u32 %s163, 1
        %s1029 = smul.addr %s1028, 8
        %s1030 = scalar_lea.vmem [#allocation11], %s1029
        // Predicated region
        $region61: #{tpu_custom_call.1} parent=43 // pred_check
          %p1031 = pneg %p173
        $region62: #{tpu_custom_call.1} parent=43 // pred_check_branch
          %1033 = sbr.rel (%p1031) target = $region64
        $region63: #{tpu_custom_call.1} parent=43 // pred_region
          %1035 = vsyncadd %s1027, 0
          %s1036 = smul.addr %s24, 2
          %s1037 = smul.addr %s1036, 4
          %s1038 = scalar_lea.hbm %s6, %s1037
          %s1040 = sshll.u32 %s1030, 4
          %s1041 = int_to_ptr.vmem [resolvable:$true] %s1040
          %s1042 = sshll.u32 %s1038, 4
          %s1043 = int_to_ptr.hbm [resolvable:$true] %s1042
          %1045 = dma.vmem_to_hbm [thread:$0]  %s1041, 128, %s1043, %s1027
        $region64: #{tpu_custom_call.1} parent=43 // pred_fallthru
          _
      $region44: #{tpu_custom_call.1} parent=5 // pred_fallthru
        _
      %p1046 = scmp.le.s32.totalorder 2, %s19
      // Predicated region
      $region65: #{tpu_custom_call.1} parent=5 // pred_check
        %p1047 = pneg %p1046
      $region66: #{tpu_custom_call.1} parent=5 // pred_check_branch
        %1049 = sbr.rel (%p1047) target = $region68
      $region67: #{tpu_custom_call.1} parent=5 // pred_region
        %s1050 = ssub.s32 %s19, 2
        // Predicated region
        $region69: #{tpu_custom_call.1} parent=67 // pred_check
          %p1051 = pneg %p179
        $region70: #{tpu_custom_call.1} parent=67 // pred_check_branch
          %1053 = sbr.rel (%p1051) target = $region72
        $region71: #{tpu_custom_call.1} parent=67 // pred_region
          %s1054 = sand.u32 %s164, 1
          %s1055 = scalar_lea.sflag [#allocation7], %s1054
          %s1056 = sand.u32 %s164, 1
          %s1057 = smul.addr %s1056, 8
          %s1058 = scalar_lea.vmem [#allocation11], %s1057
          %1060 = dma.done %s1055, 128
        $region72: #{tpu_custom_call.1} parent=67 // pred_fallthru
          _
      $region68: #{tpu_custom_call.1} parent=5 // pred_fallthru
        _
    $region6: #{tpu_custom_call.1} parent=1 // loop_footer
      %s23 = sadd.s32 1, %s19
    $region7: #{tpu_custom_call.1} parent=1 // loop_footer_branch
      %18 = sbr.rel target = $region3
    $region8: #{tpu_custom_call.1} parent=1 // loop_exit
      _
    %1061 = vsyncpa [#allocation6], 1
    %s1062 = scalar_lea.sflag [#allocation6], 1
    %1063 = vsyncpa %s1062, 1
    %1064 = vsyncpa [#allocation9], 1
    %1065 = vsyncpa [#allocation7], 1
    %s1066 = scalar_lea.sflag [#allocation7], 1
    %1067 = vsyncpa %s1066, 1

</llo_original>
